<compile_context>
chip_gen: v6e
topology: v6e:2x2x1
jax: 0.10.0
libtpu: 0.0.40
codegen_flags: <defaults>
</compile_context>

<pallas_src>
import math
import functools

import jax
import jax.numpy as jnp
from jax import lax
from jax.experimental import pallas as pl
from jax.experimental.pallas import tpu as pltpu

_BN_EPS = 1e-5
_BN_SCALE = 1.0 / math.sqrt(1.0 + _BN_EPS)


# ----------------------------- fused forward kernel --------------------------
def _fused_graph_attention_kernel(x_ref, wqkv_ref, bqkv_ref, wo_ref, bo_ref,
                                  o_ref, *, D, K, d):
    """One (batch, time) slab per grid step: QKV proj -> d-head attn -> out proj."""
    x = x_ref[0]                                                    # (N, D)
    N = x.shape[0]

    # Fused QKV projection: one (N, D) @ (D, 3D) matmul on the MXU, then
    # bias + eval-mode BatchNorm (1/sqrt(1+eps)) + ReLU (conv2d_'s F.relu_).
    qkv = jnp.dot(x, wqkv_ref[...], preferred_element_type=jnp.float32)
    qkv = jnp.maximum((qkv + bqkv_ref[...]) * _BN_SCALE, 0.0)       # (N, 3D)

    # Per-head attention with the head split done in-kernel (static lane
    # slices of width K). The 1/sqrt(d) score scale is pre-folded into the
    # Q weights/bias by the wrapper. The final output projection is fused
    # into the head loop as an accumulation over Wo row-blocks.
    acc = jnp.zeros((N, D), jnp.float32)
    for h in range(d):                                              # d static, small
        lo = h * K
        qh = qkv[:, lo:lo + K]                                      # (N, K)
        kh = qkv[:, D + lo:D + lo + K]                              # (N, K)
        vh = qkv[:, 2 * D + lo:2 * D + lo + K]                      # (N, K)

        # q @ k^T without materializing a transpose: contract last dims.
        s = lax.dot_general(qh, kh, (((1,), (1,)), ((), ())),
                            preferred_element_type=jnp.float32)     # (N, N)
        s = s - jnp.max(s, axis=-1, keepdims=True)                  # stable softmax
        p = jnp.exp(s)
        p = p * pl.reciprocal(jnp.sum(p, axis=-1, keepdims=True), approx=True)

        oh = jnp.dot(p, vh, preferred_element_type=jnp.float32)     # (N, K)
        acc = acc + jnp.dot(oh, wo_ref[lo:lo + K, :],
                            preferred_element_type=jnp.float32)     # (N, D)

    out = jnp.maximum((acc + bo_ref[...]) * _BN_SCALE, 0.0)
    o_ref[0] = out.astype(o_ref.dtype)


# ----------------------------- wrapper ----------------------------------------
def graph_attention_forward(X, params, K, d):
    B, T, N, D = X.shape
    assert D == K * d
    scale = 1.0 / math.sqrt(d)

    # Fold the 1/sqrt(d) attention scale into the Q projection (ReLU is
    # positively homogeneous) and fuse Wq/Wk/Wv into one (D, 3D) weight.
    w_qkv = jnp.concatenate(
        [params["wq"] * scale, params["wk"], params["wv"]], axis=1)          # (D, 3D)
    b_qkv = jnp.concatenate(
        [params["bq"] * scale, params["bk"], params["bv"]]).reshape(1, 3 * D)
    w_o = params["wo"]                                                       # (D, D)
    b_o = params["bo"].reshape(1, D)

    x = X.reshape(B * T, N, D)
    kern = functools.partial(_fused_graph_attention_kernel, D=D, K=K, d=d)

    out = pl.pallas_call(
        kern,
        out_shape=jax.ShapeDtypeStruct((B * T, N, D), jnp.float32),
        grid_spec=pltpu.PrefetchScalarGridSpec(
            num_scalar_prefetch=0,
            grid=(B * T,),
            in_specs=[
                pl.BlockSpec((1, N, D), lambda i: (i, 0, 0)),        # X slab
                pl.BlockSpec((D, 3 * D), lambda i: (0, 0)),          # W_qkv (resident)
                pl.BlockSpec((1, 3 * D), lambda i: (0, 0)),          # b_qkv
                pl.BlockSpec((D, D), lambda i: (0, 0)),              # W_o
                pl.BlockSpec((1, D), lambda i: (0, 0)),              # b_o
            ],
            out_specs=pl.BlockSpec((1, N, D), lambda i: (i, 0, 0)),
        ),
        compiler_params=pltpu.CompilerParams(
            dimension_semantics=("parallel",)),   # megacore-shardable axis (v7x)
    )(x, w_qkv, b_qkv, w_o, b_o)

    return out.reshape(B, T, N, D)


# ----------------------------- plain-JAX reference ----------------------------
def graph_attention_reference(X, params, K, d):
    B, T, N, D = X.shape
    hp = jax.lax.Precision.HIGHEST

    def fc_ref(x, w, b):
        return jnp.maximum((jnp.dot(x, w, precision=hp) + b) * _BN_SCALE, 0.0)

    q = fc_ref(X, params["wq"], params["bq"])
    k = fc_ref(X, params["wk"], params["bk"])
    v = fc_ref(X, params["wv"], params["bv"])

    def to_heads(y):  # torch.cat(torch.split(y, K, dim=-1), dim=0), head-major
        return jnp.transpose(y.reshape(B, T, N, d, K), (3, 0, 1, 2, 4))

    qh, kh, vh = to_heads(q), to_heads(k), to_heads(v)
    s = jnp.einsum("hbtnk,hbtmk->hbtnm", qh, kh, precision=hp) / math.sqrt(d)
    p = jax.nn.softmax(s, axis=-1)
    o = jnp.einsum("hbtnm,hbtmk->hbtnk", p, vh, precision=hp)
    o = jnp.transpose(o, (1, 2, 3, 0, 4)).reshape(B, T, N, D)
    return fc_ref(o, params["wo"], params["bo"])


# ----------------------------- parameter init ---------------------------------
def xavier_uniform_t(key, din, dout):
    # Conv2d weight is (Dout, Din, 1, 1), xavier_uniform bound sqrt(6/(Din+Dout)).
    # Stored transposed as (Din, Dout) so kernels compute x @ w.
    bound = math.sqrt(6.0 / (din + dout))
    return jax.random.uniform(key, (din, dout), jnp.float32, -bound, bound)


def init_params(key, D):
    ks = jax.random.split(key, 4)
    params = {}
    for name, kk in zip(["q", "k", "v", "o"], ks):
        params[f"w{name}"] = xavier_uniform_t(kk, D, D)
        params[f"b{name}"] = jnp.zeros((D,), jnp.float32)   # zero-init bias
    return params


if __name__ == "__main__":
    B, T, N = 2, 3, 16          # batch, time steps, graph nodes
    K, d = 4, 8                 # split width K, number of chunks (heads) d
    D = K * d                   # 32

    key = jax.random.PRNGKey(0)
    k_x, k_p = jax.random.split(key)
    X = jax.random.normal(k_x, (B, T, N, D), jnp.float32)
    params = init_params(k_p, D)

    fwd = jax.jit(functools.partial(graph_attention_forward, K=K, d=d))
    out = jax.block_until_ready(fwd(X, params))

    ref = graph_attention_reference(X, params, K, d)
    assert out.shape == (B, T, N, D)
    # Kernel uses approx-reciprocal softmax + default MXU matmul precision;
    # reference is pinned to f32 HIGHEST -> allow a slightly looser tolerance.
    assert jnp.allclose(out, ref, rtol=2e-2, atol=2e-2), "mismatch vs reference"

    print("KERNEL_OK")
</pallas_src>

<mosaic_0001>
module attributes {stable_mosaic.version = 11 : i64} {
  func.func @_fused_graph_attention_kernel(%arg0: i32, %arg1: memref<1x16x32xf32, #tpu.memory_space<vmem>>, %arg2: memref<32x96xf32, #tpu.memory_space<vmem>>, %arg3: memref<1x96xf32, #tpu.memory_space<vmem>>, %arg4: memref<32x32xf32, #tpu.memory_space<vmem>>, %arg5: memref<1x32xf32, #tpu.memory_space<vmem>>, %arg6: memref<1x16x32xf32, #tpu.memory_space<vmem>>) attributes {dimension_semantics = [#tpu.dimension_semantics<parallel>], iteration_bounds = array<i64: 6>, scalar_prefetch = 0 : i64, scratch_operands = 0 : i64, tpu.core_type = #tpu.core_type<tc>, window_params = [{transform_indices = @transform_0, window_bounds = array<i64: 1, 16, 32>}, {pipeline_mode = #tpu.pipeline_mode<synchronous>, transform_indices = @transform_1, window_bounds = array<i64: 32, 96>}, {pipeline_mode = #tpu.pipeline_mode<synchronous>, transform_indices = @transform_2, window_bounds = array<i64: 1, 96>}, {pipeline_mode = #tpu.pipeline_mode<synchronous>, transform_indices = @transform_3, window_bounds = array<i64: 32, 32>}, {pipeline_mode = #tpu.pipeline_mode<synchronous>, transform_indices = @transform_4, window_bounds = array<i64: 1, 32>}, {transform_indices = @transform_5, window_bounds = array<i64: 1, 16, 32>}]} {
    %c0 = arith.constant 0 : index
    %c0_0 = arith.constant 0 : index
    %c0_1 = arith.constant 0 : index
    %0 = vector.load %arg1[%c0, %c0_0, %c0_1] : memref<1x16x32xf32, #tpu.memory_space<vmem>>, vector<1x16x32xf32>
    %1 = vector.shape_cast %0 : vector<1x16x32xf32> to vector<16x32xf32>
    %c0_2 = arith.constant 0 : index
    %c0_3 = arith.constant 0 : index
    %2 = vector.load %arg2[%c0_2, %c0_3] : memref<32x96xf32, #tpu.memory_space<vmem>>, vector<32x96xf32>
    %cst = arith.constant dense<0.000000e+00> : vector<16x96xf32>
    %3 = tpu.matmul %1, %2, %cst {dimension_numbers = #tpu.dot_dimension_numbers<[1], [0], [0], [1], [0, 0, 1, 1], [], []>} : vector<16x32xf32>, vector<32x96xf32>, vector<16x96xf32> -> vector<16x96xf32>
    %c0_4 = arith.constant 0 : index
    %c0_5 = arith.constant 0 : index
    %4 = vector.load %arg3[%c0_4, %c0_5] : memref<1x96xf32, #tpu.memory_space<vmem>>, vector<1x96xf32>
    %5 = vector.broadcast %4 : vector<1x96xf32> to vector<16x96xf32>
    %6 = arith.addf %3, %5 : vector<16x96xf32>
    %cst_6 = arith.constant 0.999994993 : f32
    %7 = vector.broadcast %cst_6 : f32 to vector<16x96xf32>
    %8 = arith.mulf %6, %7 : vector<16x96xf32>
    %cst_7 = arith.constant 0.000000e+00 : f32
    %9 = vector.broadcast %cst_7 : f32 to vector<16x96xf32>
    %10 = arith.maximumf %8, %9 : vector<16x96xf32>
    %cst_8 = arith.constant 0.000000e+00 : f32
    %11 = vector.broadcast %cst_8 : f32 to vector<16x32xf32>
    %12 = vector.extract_strided_slice %10 {offsets = [0, 0], sizes = [16, 4], strides = [1, 1]} : vector<16x96xf32> to vector<16x4xf32>
    %13 = vector.extract_strided_slice %10 {offsets = [0, 32], sizes = [16, 4], strides = [1, 1]} : vector<16x96xf32> to vector<16x4xf32>
    %14 = vector.extract_strided_slice %10 {offsets = [0, 64], sizes = [16, 4], strides = [1, 1]} : vector<16x96xf32> to vector<16x4xf32>
    %cst_9 = arith.constant dense<0.000000e+00> : vector<16x16xf32>
    %15 = tpu.matmul %12, %13, %cst_9 {dimension_numbers = #tpu.dot_dimension_numbers<[1], [1], [0], [0], [0, 0, 1, 0], [], []>} : vector<16x4xf32>, vector<16x4xf32>, vector<16x16xf32> -> vector<16x16xf32>
    %cst_10 = arith.constant dense<0xFF800000> : vector<16xf32>
    %16 = vector.multi_reduction <maximumf>, %15, %cst_10 [1] : vector<16x16xf32> to vector<16xf32>
    %17 = vector.shape_cast %16 : vector<16xf32> to vector<16x1xf32>
    %18 = vector.broadcast %17 : vector<16x1xf32> to vector<16x16xf32>
    %19 = arith.subf %15, %18 : vector<16x16xf32>
    %20 = math.exp %19 : vector<16x16xf32>
    %cst_11 = arith.constant dense<0.000000e+00> : vector<16xf32>
    %21 = vector.multi_reduction <add>, %20, %cst_11 [1] : vector<16x16xf32> to vector<16xf32>
    %22 = vector.shape_cast %21 : vector<16xf32> to vector<16x1xf32>
    %23 = tpu.reciprocal %22 {approx = true} : vector<16x1xf32> -> vector<16x1xf32>
    %24 = vector.broadcast %23 : vector<16x1xf32> to vector<16x16xf32>
    %25 = arith.mulf %20, %24 : vector<16x16xf32>
    %cst_12 = arith.constant dense<0.000000e+00> : vector<16x4xf32>
    %26 = tpu.matmul %25, %14, %cst_12 {dimension_numbers = #tpu.dot_dimension_numbers<[1], [0], [0], [1], [0, 0, 1, 1], [], []>} : vector<16x16xf32>, vector<16x4xf32>, vector<16x4xf32> -> vector<16x4xf32>
    %c0_13 = arith.constant 0 : index
    %c0_14 = arith.constant 0 : index
    %27 = vector.load %arg4[%c0_13, %c0_14] : memref<32x32xf32, #tpu.memory_space<vmem>>, vector<4x32xf32>
    %cst_15 = arith.constant dense<0.000000e+00> : vector<16x32xf32>
    %28 = tpu.matmul %26, %27, %cst_15 {dimension_numbers = #tpu.dot_dimension_numbers<[1], [0], [0], [1], [0, 0, 1, 1], [], []>} : vector<16x4xf32>, vector<4x32xf32>, vector<16x32xf32> -> vector<16x32xf32>
    %29 = arith.addf %11, %28 : vector<16x32xf32>
    %30 = vector.extract_strided_slice %10 {offsets = [0, 4], sizes = [16, 4], strides = [1, 1]} : vector<16x96xf32> to vector<16x4xf32>
    %31 = vector.extract_strided_slice %10 {offsets = [0, 36], sizes = [16, 4], strides = [1, 1]} : vector<16x96xf32> to vector<16x4xf32>
    %32 = vector.extract_strided_slice %10 {offsets = [0, 68], sizes = [16, 4], strides = [1, 1]} : vector<16x96xf32> to vector<16x4xf32>
    %cst_16 = arith.constant dense<0.000000e+00> : vector<16x16xf32>
    %33 = tpu.matmul %30, %31, %cst_16 {dimension_numbers = #tpu.dot_dimension_numbers<[1], [1], [0], [0], [0, 0, 1, 0], [], []>} : vector<16x4xf32>, vector<16x4xf32>, vector<16x16xf32> -> vector<16x16xf32>
    %cst_17 = arith.constant dense<0xFF800000> : vector<16xf32>
    %34 = vector.multi_reduction <maximumf>, %33, %cst_17 [1] : vector<16x16xf32> to vector<16xf32>
    %35 = vector.shape_cast %34 : vector<16xf32> to vector<16x1xf32>
    %36 = vector.broadcast %35 : vector<16x1xf32> to vector<16x16xf32>
    %37 = arith.subf %33, %36 : vector<16x16xf32>
    %38 = math.exp %37 : vector<16x16xf32>
    %cst_18 = arith.constant dense<0.000000e+00> : vector<16xf32>
    %39 = vector.multi_reduction <add>, %38, %cst_18 [1] : vector<16x16xf32> to vector<16xf32>
    %40 = vector.shape_cast %39 : vector<16xf32> to vector<16x1xf32>
    %41 = tpu.reciprocal %40 {approx = true} : vector<16x1xf32> -> vector<16x1xf32>
    %42 = vector.broadcast %41 : vector<16x1xf32> to vector<16x16xf32>
    %43 = arith.mulf %38, %42 : vector<16x16xf32>
    %cst_19 = arith.constant dense<0.000000e+00> : vector<16x4xf32>
    %44 = tpu.matmul %43, %32, %cst_19 {dimension_numbers = #tpu.dot_dimension_numbers<[1], [0], [0], [1], [0, 0, 1, 1], [], []>} : vector<16x16xf32>, vector<16x4xf32>, vector<16x4xf32> -> vector<16x4xf32>
    %c4 = arith.constant 4 : index
    %c0_20 = arith.constant 0 : index
    %45 = vector.load %arg4[%c4, %c0_20] : memref<32x32xf32, #tpu.memory_space<vmem>>, vector<4x32xf32>
    %cst_21 = arith.constant dense<0.000000e+00> : vector<16x32xf32>
    %46 = tpu.matmul %44, %45, %cst_21 {dimension_numbers = #tpu.dot_dimension_numbers<[1], [0], [0], [1], [0, 0, 1, 1], [], []>} : vector<16x4xf32>, vector<4x32xf32>, vector<16x32xf32> -> vector<16x32xf32>
    %47 = arith.addf %29, %46 : vector<16x32xf32>
    %48 = vector.extract_strided_slice %10 {offsets = [0, 8], sizes = [16, 4], strides = [1, 1]} : vector<16x96xf32> to vector<16x4xf32>
    %49 = vector.extract_strided_slice %10 {offsets = [0, 40], sizes = [16, 4], strides = [1, 1]} : vector<16x96xf32> to vector<16x4xf32>
    %50 = vector.extract_strided_slice %10 {offsets = [0, 72], sizes = [16, 4], strides = [1, 1]} : vector<16x96xf32> to vector<16x4xf32>
    %cst_22 = arith.constant dense<0.000000e+00> : vector<16x16xf32>
    %51 = tpu.matmul %48, %49, %cst_22 {dimension_numbers = #tpu.dot_dimension_numbers<[1], [1], [0], [0], [0, 0, 1, 0], [], []>} : vector<16x4xf32>, vector<16x4xf32>, vector<16x16xf32> -> vector<16x16xf32>
    %cst_23 = arith.constant dense<0xFF800000> : vector<16xf32>
    %52 = vector.multi_reduction <maximumf>, %51, %cst_23 [1] : vector<16x16xf32> to vector<16xf32>
    %53 = vector.shape_cast %52 : vector<16xf32> to vector<16x1xf32>
    %54 = vector.broadcast %53 : vector<16x1xf32> to vector<16x16xf32>
    %55 = arith.subf %51, %54 : vector<16x16xf32>
    %56 = math.exp %55 : vector<16x16xf32>
    %cst_24 = arith.constant dense<0.000000e+00> : vector<16xf32>
    %57 = vector.multi_reduction <add>, %56, %cst_24 [1] : vector<16x16xf32> to vector<16xf32>
    %58 = vector.shape_cast %57 : vector<16xf32> to vector<16x1xf32>
    %59 = tpu.reciprocal %58 {approx = true} : vector<16x1xf32> -> vector<16x1xf32>
    %60 = vector.broadcast %59 : vector<16x1xf32> to vector<16x16xf32>
    %61 = arith.mulf %56, %60 : vector<16x16xf32>
    %cst_25 = arith.constant dense<0.000000e+00> : vector<16x4xf32>
    %62 = tpu.matmul %61, %50, %cst_25 {dimension_numbers = #tpu.dot_dimension_numbers<[1], [0], [0], [1], [0, 0, 1, 1], [], []>} : vector<16x16xf32>, vector<16x4xf32>, vector<16x4xf32> -> vector<16x4xf32>
    %c8 = arith.constant 8 : index
    %c0_26 = arith.constant 0 : index
    %63 = vector.load %arg4[%c8, %c0_26] : memref<32x32xf32, #tpu.memory_space<vmem>>, vector<4x32xf32>
    %cst_27 = arith.constant dense<0.000000e+00> : vector<16x32xf32>
    %64 = tpu.matmul %62, %63, %cst_27 {dimension_numbers = #tpu.dot_dimension_numbers<[1], [0], [0], [1], [0, 0, 1, 1], [], []>} : vector<16x4xf32>, vector<4x32xf32>, vector<16x32xf32> -> vector<16x32xf32>
    %65 = arith.addf %47, %64 : vector<16x32xf32>
    %66 = vector.extract_strided_slice %10 {offsets = [0, 12], sizes = [16, 4], strides = [1, 1]} : vector<16x96xf32> to vector<16x4xf32>
    %67 = vector.extract_strided_slice %10 {offsets = [0, 44], sizes = [16, 4], strides = [1, 1]} : vector<16x96xf32> to vector<16x4xf32>
    %68 = vector.extract_strided_slice %10 {offsets = [0, 76], sizes = [16, 4], strides = [1, 1]} : vector<16x96xf32> to vector<16x4xf32>
    %cst_28 = arith.constant dense<0.000000e+00> : vector<16x16xf32>
    %69 = tpu.matmul %66, %67, %cst_28 {dimension_numbers = #tpu.dot_dimension_numbers<[1], [1], [0], [0], [0, 0, 1, 0], [], []>} : vector<16x4xf32>, vector<16x4xf32>, vector<16x16xf32> -> vector<16x16xf32>
    %cst_29 = arith.constant dense<0xFF800000> : vector<16xf32>
    %70 = vector.multi_reduction <maximumf>, %69, %cst_29 [1] : vector<16x16xf32> to vector<16xf32>
    %71 = vector.shape_cast %70 : vector<16xf32> to vector<16x1xf32>
    %72 = vector.broadcast %71 : vector<16x1xf32> to vector<16x16xf32>
    %73 = arith.subf %69, %72 : vector<16x16xf32>
    %74 = math.exp %73 : vector<16x16xf32>
    %cst_30 = arith.constant dense<0.000000e+00> : vector<16xf32>
    %75 = vector.multi_reduction <add>, %74, %cst_30 [1] : vector<16x16xf32> to vector<16xf32>
    %76 = vector.shape_cast %75 : vector<16xf32> to vector<16x1xf32>
    %77 = tpu.reciprocal %76 {approx = true} : vector<16x1xf32> -> vector<16x1xf32>
    %78 = vector.broadcast %77 : vector<16x1xf32> to vector<16x16xf32>
    %79 = arith.mulf %74, %78 : vector<16x16xf32>
    %cst_31 = arith.constant dense<0.000000e+00> : vector<16x4xf32>
    %80 = tpu.matmul %79, %68, %cst_31 {dimension_numbers = #tpu.dot_dimension_numbers<[1], [0], [0], [1], [0, 0, 1, 1], [], []>} : vector<16x16xf32>, vector<16x4xf32>, vector<16x4xf32> -> vector<16x4xf32>
    %c12 = arith.constant 12 : index
    %c0_32 = arith.constant 0 : index
    %81 = vector.load %arg4[%c12, %c0_32] : memref<32x32xf32, #tpu.memory_space<vmem>>, vector<4x32xf32>
    %cst_33 = arith.constant dense<0.000000e+00> : vector<16x32xf32>
    %82 = tpu.matmul %80, %81, %cst_33 {dimension_numbers = #tpu.dot_dimension_numbers<[1], [0], [0], [1], [0, 0, 1, 1], [], []>} : vector<16x4xf32>, vector<4x32xf32>, vector<16x32xf32> -> vector<16x32xf32>
    %83 = arith.addf %65, %82 : vector<16x32xf32>
    %84 = vector.extract_strided_slice %10 {offsets = [0, 16], sizes = [16, 4], strides = [1, 1]} : vector<16x96xf32> to vector<16x4xf32>
    %85 = vector.extract_strided_slice %10 {offsets = [0, 48], sizes = [16, 4], strides = [1, 1]} : vector<16x96xf32> to vector<16x4xf32>
    %86 = vector.extract_strided_slice %10 {offsets = [0, 80], sizes = [16, 4], strides = [1, 1]} : vector<16x96xf32> to vector<16x4xf32>
    %cst_34 = arith.constant dense<0.000000e+00> : vector<16x16xf32>
    %87 = tpu.matmul %84, %85, %cst_34 {dimension_numbers = #tpu.dot_dimension_numbers<[1], [1], [0], [0], [0, 0, 1, 0], [], []>} : vector<16x4xf32>, vector<16x4xf32>, vector<16x16xf32> -> vector<16x16xf32>
    %cst_35 = arith.constant dense<0xFF800000> : vector<16xf32>
    %88 = vector.multi_reduction <maximumf>, %87, %cst_35 [1] : vector<16x16xf32> to vector<16xf32>
    %89 = vector.shape_cast %88 : vector<16xf32> to vector<16x1xf32>
    %90 = vector.broadcast %89 : vector<16x1xf32> to vector<16x16xf32>
    %91 = arith.subf %87, %90 : vector<16x16xf32>
    %92 = math.exp %91 : vector<16x16xf32>
    %cst_36 = arith.constant dense<0.000000e+00> : vector<16xf32>
    %93 = vector.multi_reduction <add>, %92, %cst_36 [1] : vector<16x16xf32> to vector<16xf32>
    %94 = vector.shape_cast %93 : vector<16xf32> to vector<16x1xf32>
    %95 = tpu.reciprocal %94 {approx = true} : vector<16x1xf32> -> vector<16x1xf32>
    %96 = vector.broadcast %95 : vector<16x1xf32> to vector<16x16xf32>
    %97 = arith.mulf %92, %96 : vector<16x16xf32>
    %cst_37 = arith.constant dense<0.000000e+00> : vector<16x4xf32>
    %98 = tpu.matmul %97, %86, %cst_37 {dimension_numbers = #tpu.dot_dimension_numbers<[1], [0], [0], [1], [0, 0, 1, 1], [], []>} : vector<16x16xf32>, vector<16x4xf32>, vector<16x4xf32> -> vector<16x4xf32>
    %c16 = arith.constant 16 : index
    %c0_38 = arith.constant 0 : index
    %99 = vector.load %arg4[%c16, %c0_38] : memref<32x32xf32, #tpu.memory_space<vmem>>, vector<4x32xf32>
    %cst_39 = arith.constant dense<0.000000e+00> : vector<16x32xf32>
    %100 = tpu.matmul %98, %99, %cst_39 {dimension_numbers = #tpu.dot_dimension_numbers<[1], [0], [0], [1], [0, 0, 1, 1], [], []>} : vector<16x4xf32>, vector<4x32xf32>, vector<16x32xf32> -> vector<16x32xf32>
    %101 = arith.addf %83, %100 : vector<16x32xf32>
    %102 = vector.extract_strided_slice %10 {offsets = [0, 20], sizes = [16, 4], strides = [1, 1]} : vector<16x96xf32> to vector<16x4xf32>
    %103 = vector.extract_strided_slice %10 {offsets = [0, 52], sizes = [16, 4], strides = [1, 1]} : vector<16x96xf32> to vector<16x4xf32>
    %104 = vector.extract_strided_slice %10 {offsets = [0, 84], sizes = [16, 4], strides = [1, 1]} : vector<16x96xf32> to vector<16x4xf32>
    %cst_40 = arith.constant dense<0.000000e+00> : vector<16x16xf32>
    %105 = tpu.matmul %102, %103, %cst_40 {dimension_numbers = #tpu.dot_dimension_numbers<[1], [1], [0], [0], [0, 0, 1, 0], [], []>} : vector<16x4xf32>, vector<16x4xf32>, vector<16x16xf32> -> vector<16x16xf32>
    %cst_41 = arith.constant dense<0xFF800000> : vector<16xf32>
    %106 = vector.multi_reduction <maximumf>, %105, %cst_41 [1] : vector<16x16xf32> to vector<16xf32>
    %107 = vector.shape_cast %106 : vector<16xf32> to vector<16x1xf32>
    %108 = vector.broadcast %107 : vector<16x1xf32> to vector<16x16xf32>
    %109 = arith.subf %105, %108 : vector<16x16xf32>
    %110 = math.exp %109 : vector<16x16xf32>
    %cst_42 = arith.constant dense<0.000000e+00> : vector<16xf32>
    %111 = vector.multi_reduction <add>, %110, %cst_42 [1] : vector<16x16xf32> to vector<16xf32>
    %112 = vector.shape_cast %111 : vector<16xf32> to vector<16x1xf32>
    %113 = tpu.reciprocal %112 {approx = true} : vector<16x1xf32> -> vector<16x1xf32>
    %114 = vector.broadcast %113 : vector<16x1xf32> to vector<16x16xf32>
    %115 = arith.mulf %110, %114 : vector<16x16xf32>
    %cst_43 = arith.constant dense<0.000000e+00> : vector<16x4xf32>
    %116 = tpu.matmul %115, %104, %cst_43 {dimension_numbers = #tpu.dot_dimension_numbers<[1], [0], [0], [1], [0, 0, 1, 1], [], []>} : vector<16x16xf32>, vector<16x4xf32>, vector<16x4xf32> -> vector<16x4xf32>
    %c20 = arith.constant 20 : index
    %c0_44 = arith.constant 0 : index
    %117 = vector.load %arg4[%c20, %c0_44] : memref<32x32xf32, #tpu.memory_space<vmem>>, vector<4x32xf32>
    %cst_45 = arith.constant dense<0.000000e+00> : vector<16x32xf32>
    %118 = tpu.matmul %116, %117, %cst_45 {dimension_numbers = #tpu.dot_dimension_numbers<[1], [0], [0], [1], [0, 0, 1, 1], [], []>} : vector<16x4xf32>, vector<4x32xf32>, vector<16x32xf32> -> vector<16x32xf32>
    %119 = arith.addf %101, %118 : vector<16x32xf32>
    %120 = vector.extract_strided_slice %10 {offsets = [0, 24], sizes = [16, 4], strides = [1, 1]} : vector<16x96xf32> to vector<16x4xf32>
    %121 = vector.extract_strided_slice %10 {offsets = [0, 56], sizes = [16, 4], strides = [1, 1]} : vector<16x96xf32> to vector<16x4xf32>
    %122 = vector.extract_strided_slice %10 {offsets = [0, 88], sizes = [16, 4], strides = [1, 1]} : vector<16x96xf32> to vector<16x4xf32>
    %cst_46 = arith.constant dense<0.000000e+00> : vector<16x16xf32>
    %123 = tpu.matmul %120, %121, %cst_46 {dimension_numbers = #tpu.dot_dimension_numbers<[1], [1], [0], [0], [0, 0, 1, 0], [], []>} : vector<16x4xf32>, vector<16x4xf32>, vector<16x16xf32> -> vector<16x16xf32>
    %cst_47 = arith.constant dense<0xFF800000> : vector<16xf32>
    %124 = vector.multi_reduction <maximumf>, %123, %cst_47 [1] : vector<16x16xf32> to vector<16xf32>
    %125 = vector.shape_cast %124 : vector<16xf32> to vector<16x1xf32>
    %126 = vector.broadcast %125 : vector<16x1xf32> to vector<16x16xf32>
    %127 = arith.subf %123, %126 : vector<16x16xf32>
    %128 = math.exp %127 : vector<16x16xf32>
    %cst_48 = arith.constant dense<0.000000e+00> : vector<16xf32>
    %129 = vector.multi_reduction <add>, %128, %cst_48 [1] : vector<16x16xf32> to vector<16xf32>
    %130 = vector.shape_cast %129 : vector<16xf32> to vector<16x1xf32>
    %131 = tpu.reciprocal %130 {approx = true} : vector<16x1xf32> -> vector<16x1xf32>
    %132 = vector.broadcast %131 : vector<16x1xf32> to vector<16x16xf32>
    %133 = arith.mulf %128, %132 : vector<16x16xf32>
    %cst_49 = arith.constant dense<0.000000e+00> : vector<16x4xf32>
    %134 = tpu.matmul %133, %122, %cst_49 {dimension_numbers = #tpu.dot_dimension_numbers<[1], [0], [0], [1], [0, 0, 1, 1], [], []>} : vector<16x16xf32>, vector<16x4xf32>, vector<16x4xf32> -> vector<16x4xf32>
    %c24 = arith.constant 24 : index
    %c0_50 = arith.constant 0 : index
    %135 = vector.load %arg4[%c24, %c0_50] : memref<32x32xf32, #tpu.memory_space<vmem>>, vector<4x32xf32>
    %cst_51 = arith.constant dense<0.000000e+00> : vector<16x32xf32>
    %136 = tpu.matmul %134, %135, %cst_51 {dimension_numbers = #tpu.dot_dimension_numbers<[1], [0], [0], [1], [0, 0, 1, 1], [], []>} : vector<16x4xf32>, vector<4x32xf32>, vector<16x32xf32> -> vector<16x32xf32>
    %137 = arith.addf %119, %136 : vector<16x32xf32>
    %138 = vector.extract_strided_slice %10 {offsets = [0, 28], sizes = [16, 4], strides = [1, 1]} : vector<16x96xf32> to vector<16x4xf32>
    %139 = vector.extract_strided_slice %10 {offsets = [0, 60], sizes = [16, 4], strides = [1, 1]} : vector<16x96xf32> to vector<16x4xf32>
    %140 = vector.extract_strided_slice %10 {offsets = [0, 92], sizes = [16, 4], strides = [1, 1]} : vector<16x96xf32> to vector<16x4xf32>
    %cst_52 = arith.constant dense<0.000000e+00> : vector<16x16xf32>
    %141 = tpu.matmul %138, %139, %cst_52 {dimension_numbers = #tpu.dot_dimension_numbers<[1], [1], [0], [0], [0, 0, 1, 0], [], []>} : vector<16x4xf32>, vector<16x4xf32>, vector<16x16xf32> -> vector<16x16xf32>
    %cst_53 = arith.constant dense<0xFF800000> : vector<16xf32>
    %142 = vector.multi_reduction <maximumf>, %141, %cst_53 [1] : vector<16x16xf32> to vector<16xf32>
    %143 = vector.shape_cast %142 : vector<16xf32> to vector<16x1xf32>
    %144 = vector.broadcast %143 : vector<16x1xf32> to vector<16x16xf32>
    %145 = arith.subf %141, %144 : vector<16x16xf32>
    %146 = math.exp %145 : vector<16x16xf32>
    %cst_54 = arith.constant dense<0.000000e+00> : vector<16xf32>
    %147 = vector.multi_reduction <add>, %146, %cst_54 [1] : vector<16x16xf32> to vector<16xf32>
    %148 = vector.shape_cast %147 : vector<16xf32> to vector<16x1xf32>
    %149 = tpu.reciprocal %148 {approx = true} : vector<16x1xf32> -> vector<16x1xf32>
    %150 = vector.broadcast %149 : vector<16x1xf32> to vector<16x16xf32>
    %151 = arith.mulf %146, %150 : vector<16x16xf32>
    %cst_55 = arith.constant dense<0.000000e+00> : vector<16x4xf32>
    %152 = tpu.matmul %151, %140, %cst_55 {dimension_numbers = #tpu.dot_dimension_numbers<[1], [0], [0], [1], [0, 0, 1, 1], [], []>} : vector<16x16xf32>, vector<16x4xf32>, vector<16x4xf32> -> vector<16x4xf32>
    %c28 = arith.constant 28 : index
    %c0_56 = arith.constant 0 : index
    %153 = vector.load %arg4[%c28, %c0_56] : memref<32x32xf32, #tpu.memory_space<vmem>>, vector<4x32xf32>
    %cst_57 = arith.constant dense<0.000000e+00> : vector<16x32xf32>
    %154 = tpu.matmul %152, %153, %cst_57 {dimension_numbers = #tpu.dot_dimension_numbers<[1], [0], [0], [1], [0, 0, 1, 1], [], []>} : vector<16x4xf32>, vector<4x32xf32>, vector<16x32xf32> -> vector<16x32xf32>
    %155 = arith.addf %137, %154 : vector<16x32xf32>
    %c0_58 = arith.constant 0 : index
    %c0_59 = arith.constant 0 : index
    %156 = vector.load %arg5[%c0_58, %c0_59] : memref<1x32xf32, #tpu.memory_space<vmem>>, vector<1x32xf32>
    %157 = vector.broadcast %156 : vector<1x32xf32> to vector<16x32xf32>
    %158 = arith.addf %155, %157 : vector<16x32xf32>
    %cst_60 = arith.constant 0.999994993 : f32
    %159 = vector.broadcast %cst_60 : f32 to vector<16x32xf32>
    %160 = arith.mulf %158, %159 : vector<16x32xf32>
    %cst_61 = arith.constant 0.000000e+00 : f32
    %161 = vector.broadcast %cst_61 : f32 to vector<16x32xf32>
    %162 = arith.maximumf %160, %161 : vector<16x32xf32>
    %c0_62 = arith.constant 0 : index
    %c0_63 = arith.constant 0 : index
    %c0_64 = arith.constant 0 : index
    %163 = vector.load %arg6[%c0_62, %c0_63, %c0_64] : memref<1x16x32xf32, #tpu.memory_space<vmem>>, vector<1x16x32xf32>
    %164 = vector.shape_cast %163 : vector<1x16x32xf32> to vector<16x32xf32>
    %165 = vector.shape_cast %162 : vector<16x32xf32> to vector<1x16x32xf32>
    tpu.vector_store %arg6[%c0_62, %c0_63, %c0_64], %165 {strides = array<i32>} : memref<1x16x32xf32, #tpu.memory_space<vmem>>, vector<1x16x32xf32>,
    return
  }
  func.func @transform_0(%arg0: i32) -> (i32, i32, i32) {
    %c0_i32 = arith.constant 0 : i32
    %c0_i32_0 = arith.constant 0 : i32
    %c0_i32_1 = arith.constant 0 : i32
    return %arg0, %c0_i32, %c0_i32_0 : i32, i32, i32
  }
  func.func @transform_1(%arg0: i32) -> (i32, i32) {
    %c0_i32 = arith.constant 0 : i32
    %c0_i32_0 = arith.constant 0 : i32
    %c0_i32_1 = arith.constant 0 : i32
    return %c0_i32, %c0_i32_0 : i32, i32
  }
  func.func @transform_2(%arg0: i32) -> (i32, i32) {
    %c0_i32 = arith.constant 0 : i32
    %c0_i32_0 = arith.constant 0 : i32
    %c0_i32_1 = arith.constant 0 : i32
    return %c0_i32, %c0_i32_0 : i32, i32
  }
  func.func @transform_3(%arg0: i32) -> (i32, i32) {
    %c0_i32 = arith.constant 0 : i32
    %c0_i32_0 = arith.constant 0 : i32
    %c0_i32_1 = arith.constant 0 : i32
    return %c0_i32, %c0_i32_0 : i32, i32
  }
  func.func @transform_4(%arg0: i32) -> (i32, i32) {
    %c0_i32 = arith.constant 0 : i32
    %c0_i32_0 = arith.constant 0 : i32
    %c0_i32_1 = arith.constant 0 : i32
    return %c0_i32, %c0_i32_0 : i32, i32
  }
  func.func @transform_5(%arg0: i32) -> (i32, i32, i32) {
    %c0_i32 = arith.constant 0 : i32
    %c0_i32_0 = arith.constant 0 : i32
    %c0_i32_1 = arith.constant 0 : i32
    return %arg0, %c0_i32, %c0_i32_0 : i32, i32, i32
  }
}

</mosaic_0001>

<llo_original>
// kernel: graph_attention_forward.1
$region0: #{graph_attention_forward.1}
  #allocation0 [shape = 'u32[]', space=smem, size = 0x4, offset = 0x4, fixed_abs, tag = 'smem constant byte address 0x4 - core index']
  #allocation1 [shape = 'u32[144,128]{1,0:T(1,128)}', space=vmem, size = 0x12000, scoped, tag = 'internal scratch']
  %s0 = inlined_call_operand.vmem [shape: f32[6,16,32], index: 0, kind: input, shape index: {}]
  %s1 = inlined_call_operand.vmem [shape: f32[32,96], index: 1, kind: input, shape index: {}]
  %s2 = inlined_call_operand.vmem [shape: f32[1,96], index: 2, kind: input, shape index: {}]
  %s3 = inlined_call_operand.vmem [shape: f32[32,32], index: 3, kind: input, shape index: {}]
  %s4 = inlined_call_operand.vmem [shape: f32[1,32], index: 4, kind: input, shape index: {}]
  %s5 = inlined_call_operand.hbm [shape: f32[6,16,32], index: 5, kind: output, shape index: {}]
  %s6 = sld [smem:[#allocation0]]
  $region53: #{graph_attention_forward.1} parent=0
    _
  %s8 = ssub.s32 1, %s6
  %s9 = scalar_select 0, %s8, %s6
  $region1: #{graph_attention_forward.1} parent=0
    #allocation2 [shape = 'u8[16384]{0}', space=vmem, size = 0x4000, scoped, tag = 'output window, operand 0']
    #allocation3 [shape = 's32[2]{0}', space=sflag, size = 0x8, scoped, tag = 'scoped memory for graph_attention_forward.1']
    %10 = vsyncpa [#allocation3], 0
    %s11 = scalar_lea.sflag [#allocation3], 1
    %12 = vsyncpa %s11, 0
    loop: start=0, step=1, limit=8
    $region2: #{graph_attention_forward.1} parent=1 // loop_pre_header
      _
    $region3: #{graph_attention_forward.1} parent=1 // loop_header
      %s14 = sphi 0, %s18
      %p15 = scmp.ge.s32.totalorder %s14, 8
      %s24 = sphi 0, %s26
      %s27 = sphi 0, %s24
      %s28 = sphi 0, %s27
      %s44 = sphi 0, %s28
      %s48 = sphi 0, %s48
      %s50 = sphi 0, %s48
      %s51 = sphi 0, %s50
      %s65 = sphi 0, %s51
      %s69 = sphi 0, %s69
      %s71 = sphi 0, %s69
      %s72 = sphi 0, %s71
      %s86 = sphi 0, %s72
      %s90 = sphi 0, %s90
      %s92 = sphi 0, %s90
      %s93 = sphi 0, %s92
      %s107 = sphi 0, %s93
      %s111 = sphi 0, %s111
      %s113 = sphi 0, %s111
      %s114 = sphi 0, %s113
      %s128 = sphi 0, %s114
      %s134 = sphi 0, %s136
      %s137 = sphi 0, %s134
      %s138 = sphi 0, %s137
      %s154 = sphi 0, %s138
    $region4: #{graph_attention_forward.1} parent=1 // loop_header_branch
      %17 = sbr.rel (%p15) target = $region8
    $region5: #{graph_attention_forward.1} parent=1 // loop_body
      %s19 = ssub.s32 %s14, 1
      %s20 = ssub.s32 %s14, 2
      %s21 = sadd.s32 %s14, 1
      %s22 = ssub.s32 %s14, %s21
      %p23 = scmp.eq.s32.totalorder %s22, 0
      %s25 = sadd.s32 %s24, 1
      %s26 = scalar_select %p23, %s24, %s25
      %p29 = pneg %p23
      %p30 = scmp.eq.s32.totalorder %s14, 5
      %p31 = por %p29, %p30
      %p32 = scmp.ne.s32.totalorder %s24, %s27
      %p33 = scmp.eq.s32.totalorder %s14, 0
      %p34 = por %p32, %p33
      %p35 = scmp.ne.s32.totalorder %s24, %s27
      %p36 = scmp.eq.s32.totalorder %s19, 5
      %p37 = por %p35, %p36
      %p38 = scmp.ne.s32.totalorder %s27, %s28
      %p39 = scmp.eq.s32.totalorder %s19, 0
      %p40 = por %p38, %p39
      %p41 = scmp.ne.s32.totalorder %s27, %s28
      %p42 = scmp.eq.s32.totalorder %s20, 5
      %p43 = por %p41, %p42
      %p45 = scmp.ne.s32.totalorder %s28, %s44
      %p46 = scmp.eq.s32.totalorder %s20, 0
      %p47 = por %p45, %p46
      %s49 = sadd.s32 %s48, 1
      %p52 = scmp.eq.s32.totalorder %s14, 5
      %p53 = scmp.ne.s32.totalorder %s48, %s50
      %p54 = scmp.eq.s32.totalorder %s14, 0
      %p55 = por %p53, %p54
      %p56 = scmp.ne.s32.totalorder %s48, %s50
      %p57 = scmp.eq.s32.totalorder %s19, 5
      %p58 = por %p56, %p57
      %p59 = scmp.ne.s32.totalorder %s50, %s51
      %p60 = scmp.eq.s32.totalorder %s19, 0
      %p61 = por %p59, %p60
      %p62 = scmp.ne.s32.totalorder %s50, %s51
      %p63 = scmp.eq.s32.totalorder %s20, 5
      %p64 = por %p62, %p63
      %p66 = scmp.ne.s32.totalorder %s51, %s65
      %p67 = scmp.eq.s32.totalorder %s20, 0
      %p68 = por %p66, %p67
      %s70 = sadd.s32 %s69, 1
      %p73 = scmp.eq.s32.totalorder %s14, 5
      %p74 = scmp.ne.s32.totalorder %s69, %s71
      %p75 = scmp.eq.s32.totalorder %s14, 0
      %p76 = por %p74, %p75
      %p77 = scmp.ne.s32.totalorder %s69, %s71
      %p78 = scmp.eq.s32.totalorder %s19, 5
      %p79 = por %p77, %p78
      %p80 = scmp.ne.s32.totalorder %s71, %s72
      %p81 = scmp.eq.s32.totalorder %s19, 0
      %p82 = por %p80, %p81
      %p83 = scmp.ne.s32.totalorder %s71, %s72
      %p84 = scmp.eq.s32.totalorder %s20, 5
      %p85 = por %p83, %p84
      %p87 = scmp.ne.s32.totalorder %s72, %s86
      %p88 = scmp.eq.s32.totalorder %s20, 0
      %p89 = por %p87, %p88
      %s91 = sadd.s32 %s90, 1
      %p94 = scmp.eq.s32.totalorder %s14, 5
      %p95 = scmp.ne.s32.totalorder %s90, %s92
      %p96 = scmp.eq.s32.totalorder %s14, 0
      %p97 = por %p95, %p96
      %p98 = scmp.ne.s32.totalorder %s90, %s92
      %p99 = scmp.eq.s32.totalorder %s19, 5
      %p100 = por %p98, %p99
      %p101 = scmp.ne.s32.totalorder %s92, %s93
      %p102 = scmp.eq.s32.totalorder %s19, 0
      %p103 = por %p101, %p102
      %p104 = scmp.ne.s32.totalorder %s92, %s93
      %p105 = scmp.eq.s32.totalorder %s20, 5
      %p106 = por %p104, %p105
      %p108 = scmp.ne.s32.totalorder %s93, %s107
      %p109 = scmp.eq.s32.totalorder %s20, 0
      %p110 = por %p108, %p109
      %s112 = sadd.s32 %s111, 1
      %p115 = scmp.eq.s32.totalorder %s14, 5
      %p116 = scmp.ne.s32.totalorder %s111, %s113
      %p117 = scmp.eq.s32.totalorder %s14, 0
      %p118 = por %p116, %p117
      %p119 = scmp.ne.s32.totalorder %s111, %s113
      %p120 = scmp.eq.s32.totalorder %s19, 5
      %p121 = por %p119, %p120
      %p122 = scmp.ne.s32.totalorder %s113, %s114
      %p123 = scmp.eq.s32.totalorder %s19, 0
      %p124 = por %p122, %p123
      %p125 = scmp.ne.s32.totalorder %s113, %s114
      %p126 = scmp.eq.s32.totalorder %s20, 5
      %p127 = por %p125, %p126
      %p129 = scmp.ne.s32.totalorder %s114, %s128
      %p130 = scmp.eq.s32.totalorder %s20, 0
      %p131 = por %p129, %p130
      %s132 = ssub.s32 %s14, %s21
      %p133 = scmp.eq.s32.totalorder %s132, 0
      %s135 = sadd.s32 %s134, 1
      %s136 = scalar_select %p133, %s134, %s135
      %p139 = pneg %p133
      %p140 = scmp.eq.s32.totalorder %s14, 5
      %p141 = por %p139, %p140
      %p142 = scmp.ne.s32.totalorder %s134, %s137
      %p143 = scmp.eq.s32.totalorder %s14, 0
      %p144 = por %p142, %p143
      %p145 = scmp.ne.s32.totalorder %s134, %s137
      %p146 = scmp.eq.s32.totalorder %s19, 5
      %p147 = por %p145, %p146
      %p148 = scmp.ne.s32.totalorder %s137, %s138
      %p149 = scmp.eq.s32.totalorder %s19, 0
      %p150 = por %p148, %p149
      %p151 = scmp.ne.s32.totalorder %s137, %s138
      %p152 = scmp.eq.s32.totalorder %s20, 5
      %p153 = por %p151, %p152
      %p155 = scmp.ne.s32.totalorder %s138, %s154
      %p156 = scmp.eq.s32.totalorder %s20, 0
      %p157 = por %p155, %p156
      %p158 = scmp.le.s32.totalorder 1, %s14
      %p159 = scmp.lt.s32.totalorder %s14, 7
      %p160 = pnand %p158, %p159
      %p161 = pneg %p160
      // Predicated region
      $region9: #{graph_attention_forward.1} parent=5 // pred_check
        _
      $region10: #{graph_attention_forward.1} parent=5 // pred_check_branch
        %163 = sbr.rel (%p160) target = $region12
      $region11: #{graph_attention_forward.1} parent=5 // pred_region
        %s164 = ssub.s32 %s14, 1
        // Predicated region
        $region13: #{graph_attention_forward.1} parent=11 // pred_check
          %p165 = pneg %p61
        $region14: #{graph_attention_forward.1} parent=11 // pred_check_branch
          %167 = sbr.rel (%p165) target = $region16
        $region15: #{graph_attention_forward.1} parent=11 // pred_region
          _
        $region16: #{graph_attention_forward.1} parent=11 // pred_fallthru
          _
        // Predicated region
        $region17: #{graph_attention_forward.1} parent=11 // pred_check
          %p168 = pneg %p82
        $region18: #{graph_attention_forward.1} parent=11 // pred_check_branch
          %170 = sbr.rel (%p168) target = $region20
        $region19: #{graph_attention_forward.1} parent=11 // pred_region
          _
        $region20: #{graph_attention_forward.1} parent=11 // pred_fallthru
          _
        // Predicated region
        $region21: #{graph_attention_forward.1} parent=11 // pred_check
          %p171 = pneg %p103
        $region22: #{graph_attention_forward.1} parent=11 // pred_check_branch
          %173 = sbr.rel (%p171) target = $region24
        $region23: #{graph_attention_forward.1} parent=11 // pred_region
          _
        $region24: #{graph_attention_forward.1} parent=11 // pred_fallthru
          _
        // Predicated region
        $region25: #{graph_attention_forward.1} parent=11 // pred_check
          %p174 = pneg %p124
        $region26: #{graph_attention_forward.1} parent=11 // pred_check_branch
          %176 = sbr.rel (%p174) target = $region28
        $region27: #{graph_attention_forward.1} parent=11 // pred_region
          _
        $region28: #{graph_attention_forward.1} parent=11 // pred_fallthru
          _
      $region12: #{graph_attention_forward.1} parent=5 // pred_fallthru
        _
      %p177 = scmp.lt.s32.totalorder %s14, 6
      // Predicated region
      $region29: #{graph_attention_forward.1} parent=5 // pred_check
        %p178 = pneg %p177
      $region30: #{graph_attention_forward.1} parent=5 // pred_check_branch
        %180 = sbr.rel (%p178) target = $region32
      $region31: #{graph_attention_forward.1} parent=5 // pred_region
        // Predicated region
        $region33: #{graph_attention_forward.1} parent=31 // pred_check
          %p181 = pneg %p34
        $region34: #{graph_attention_forward.1} parent=31 // pred_check_branch
          %183 = sbr.rel (%p181) target = $region36
        $region35: #{graph_attention_forward.1} parent=31 // pred_region
          %p184 = scmp.lt.s32.totalorder %s14, 5
          %s185 = scalar_select %p184, %s14, 5
          %s186 = smul.addr %s185, 2
          %s187 = smul.addr %s186, 8
          %s188 = scalar_lea.vmem %s0, %s187
        $region36: #{graph_attention_forward.1} parent=31 // pred_fallthru
          _
      $region32: #{graph_attention_forward.1} parent=5 // pred_fallthru
        _
      %p189 = scmp.le.s32.totalorder 1, %s14
      %p190 = scmp.lt.s32.totalorder %s14, 7
      %p191 = pnand %p189, %p190
      %p192 = pneg %p191
      // Predicated region
      $region37: #{graph_attention_forward.1} parent=5 // pred_check
        _
      $region38: #{graph_attention_forward.1} parent=5 // pred_check_branch
        %194 = sbr.rel (%p191) target = $region40
      $region39: #{graph_attention_forward.1} parent=5 // pred_region
        %s195 = ssub.s32 %s14, 1
        %p196 = scmp.lt.s32.totalorder %s19, 5
        %s197 = scalar_select %p196, %s19, 5
        %s198 = smul.addr %s197, 2
        %s199 = smul.addr %s198, 8
        %s200 = scalar_lea.vmem %s0, %s199
        %p201 = pneg %p40
        %p202 = pneg %p37
        %p203 = pneg %p61
        %p204 = pneg %p58
        %p205 = pneg %p82
        %p206 = pneg %p79
        %p207 = pneg %p103
        %p208 = pneg %p100
        %p209 = pneg %p124
        %p210 = pneg %p121
        %p211 = pneg %p150
        %p212 = pneg %p147
        %s213 = sand.u32 %s137, 1
        %s214 = scalar_lea.sflag [#allocation3], %s213
        %s215 = sand.u32 %s137, 1
        %s216 = smul.addr %s215, 16
        %s217 = scalar_lea.vmem [#allocation2], %s216
        %p218 = scmp.lt.s32.totalorder %s19, 5
        %s219 = scalar_select %p218, %s19, 5
        %s220 = smul.addr %s219, 2
        %s221 = smul.addr %s220, 8
        %s222 = scalar_lea.vmem %s0, %s221
        %v223 = vld [vmem:[%s222] sm:$0xff]
        %v224 = vld [vmem:[%s222 + $0x8] sm:$0xff]
        %v225 = vld [vmem:[%s1] sm:$0xff]
        %v226 = vld [vmem:[%s1 + $0x8] sm:$0xff]
        %v227 = vld [vmem:[%s1 + $0x10] sm:$0xff]
        %v228 = vld [vmem:[%s1 + $0x18] sm:$0xff]
        %v229 = vld [vmem:[%s2] sm:$0x1]
        %v231 = vlaneseq
        %v232 = vshrl.u32 %v231, 7
        %v233 = vsub.s32 0, %v232
        %v234 = vrot.slane %v229, %v233
        %vm236 = vcmask 261120
        %v238 = vsel %vm236, %v223, 0
        %v241 = vsel %vm236, %v224, 0
        %243 = vmatprep.subr.mxu0 0.0
        %244 = vmatpush1.msra.mxu0 0.0
        %245 = vmatprep.subr.mxu0 0.0
        %246 = vmatpush1.msra.mxu0 0.0
        %247 = vmatprep.subr.mxu0 0.0
        %248 = vmatpush1.msra.mxu0 0.0
        %249 = vmatprep.subr.mxu0 0.0
        %250 = vmatpush1.msra.mxu0 0.0
        %251 = vmatprep.subr.mxu0 0.0
        %252 = vmatpush1.msra.mxu0 0.0
        %253 = vmatprep.subr.mxu0 0.0
        %254 = vmatpush1.msra.mxu0 0.0
        %255 = vmatprep.subr.mxu0 0.0
        %256 = vmatpush1.msra.mxu0 0.0
        %257 = vmatprep.subr.mxu0 0.0
        %258 = vmatpush1.msra.mxu0 0.0
        %259 = vmatprep.subr.mxu0 0.0
        %260 = vmatpush1.msra.mxu0 0.0
        %261 = vmatprep.subr.mxu0 0.0
        %262 = vmatpush1.msra.mxu0 0.0
        %263 = vmatprep.subr.mxu0 0.0
        %264 = vmatpush1.msra.mxu0 0.0
        %265 = vmatprep.subr.mxu0 0.0
        %266 = vmatpush1.msra.mxu0 0.0
        %267 = vmatprep.subr.mxu0 0.0
        %268 = vmatpush1.msra.mxu0 %v228
        %269 = vmatprep.subr.mxu0 0.0
        %270 = vmatpush1.msra.mxu0 %v227
        %271 = vmatprep.subr.mxu0 0.0
        %272 = vmatpush1.msra.mxu0 %v226
        %273 = vmatprep.subr.mxu0 0.0
        %274 = vmatpush1.msra.mxu0 %v225
        %275 = vmatprep.subr.mxu0 0.0
        %276 = vmatpush2.msra.mxu0 0.0
        %277 = vmatprep.subr.mxu0 0.0
        %278 = vmatpush2.msra.mxu0 0.0
        %279 = vmatprep.subr.mxu0 0.0
        %280 = vmatpush2.msra.mxu0 0.0
        %281 = vmatprep.subr.mxu0 0.0
        %282 = vmatpush2.msra.mxu0 0.0
        %283 = vmatprep.subr.mxu0 0.0
        %284 = vmatpush2.msra.mxu0 0.0
        %285 = vmatprep.subr.mxu0 0.0
        %286 = vmatpush2.msra.mxu0 0.0
        %287 = vmatprep.subr.mxu0 0.0
        %288 = vmatpush2.msra.mxu0 0.0
        %289 = vmatprep.subr.mxu0 0.0
        %290 = vmatpush2.msra.mxu0 0.0
        %291 = vmatprep.subr.mxu0 0.0
        %292 = vmatpush2.msra.mxu0 0.0
        %293 = vmatprep.subr.mxu0 0.0
        %294 = vmatpush2.msra.mxu0 0.0
        %295 = vmatprep.subr.mxu0 0.0
        %296 = vmatpush2.msra.mxu0 0.0
        %297 = vmatprep.subr.mxu0 0.0
        %298 = vmatpush2.msra.mxu0 0.0
        %299 = vmatprep.subr.mxu0 0.0
        %300 = vmatpush2.msra.mxu0 0.0
        %301 = vmatprep.subr.mxu0 0.0
        %302 = vmatpush2.msra.mxu0 0.0
        %303 = vmatprep.subr.mxu0 0.0
        %304 = vmatpush2.msra.mxu0 0.0
        %305 = vmatprep.subr.mxu0 0.0
        %306 = vmatpush2.msra.mxu0 0.0
        %307 = vmatprep.mubr.f32.mxu0 0.0
        %308 = vmatmul.mubr.f32.gmra.mxu0 %v238
        %v309 = vpop.f32.mrf.mxu0
        %v310 = vadd.f32 %v234, %v309
        %v311 = vpop.f32.mrf.mxu0
        %312 = vmatprep.mubr.f32.mxu0 0.0
        %313 = vmatmul.mubr.f32.gmra.mxu0 %v241
        %v314 = vpop.f32.mrf.mxu0
        %v315 = vadd.f32 %v234, %v314
        %v316 = vpop.f32.mrf.mxu0
        %317 = vdwg.mxu0
        %v318 = vmul.f32 %v310, 0.999995
        %v319 = vmul.f32 %v315, 0.999995
        %v320 = vmax.f32 %v318, 0.0
        %v321 = vmax.f32 %v319, 0.0
        %324 = vrot.lane.b32.xlu0 %v320, 96
        %v325 = vpop.permute.xlu0 %324
        %326 = vrot.lane.b32.xlu0 %v321, 96
        %v327 = vpop.permute.xlu0 %326
        %vm328 = vcmask 31744
        %v329 = vsel %vm328, %v320, 0
        %v331 = vsel %vm328, %v321, 0
        %v333 = vsel %vm328, %v325, 0
        %v335 = vsel %vm328, %v327, 0
        %337 = vmatprep.subr.mxu0 0.0
        %338 = vmatpush1.xpose.msra.mxu0 0.0
        %339 = vmatprep.subr.mxu0 0.0
        %340 = vmatpush1.xpose.msra.mxu0 0.0
        %341 = vmatprep.subr.mxu0 0.0
        %342 = vmatpush1.xpose.msra.mxu0 0.0
        %343 = vmatprep.subr.mxu0 0.0
        %344 = vmatpush1.xpose.msra.mxu0 0.0
        %345 = vmatprep.subr.mxu0 0.0
        %346 = vmatpush1.xpose.msra.mxu0 0.0
        %347 = vmatprep.subr.mxu0 0.0
        %348 = vmatpush1.xpose.msra.mxu0 0.0
        %349 = vmatprep.subr.mxu0 0.0
        %350 = vmatpush1.xpose.msra.mxu0 0.0
        %351 = vmatprep.subr.mxu0 0.0
        %352 = vmatpush1.xpose.msra.mxu0 0.0
        %353 = vmatprep.subr.mxu0 0.0
        %354 = vmatpush1.xpose.msra.mxu0 0.0
        %355 = vmatprep.subr.mxu0 0.0
        %356 = vmatpush1.xpose.msra.mxu0 0.0
        %357 = vmatprep.subr.mxu0 0.0
        %358 = vmatpush1.xpose.msra.mxu0 0.0
        %359 = vmatprep.subr.mxu0 0.0
        %360 = vmatpush1.xpose.msra.mxu0 0.0
        %361 = vmatprep.subr.mxu0 0.0
        %362 = vmatpush1.xpose.msra.mxu0 0.0
        %363 = vmatprep.subr.mxu0 0.0
        %364 = vmatpush1.xpose.msra.mxu0 0.0
        %365 = vmatprep.subr.mxu0 0.0
        %366 = vmatpush1.xpose.msra.mxu0 %v335
        %367 = vmatprep.subr.mxu0 0.0
        %368 = vmatpush1.xpose.msra.mxu0 %v333
        %369 = vmatprep.subr.mxu0 0.0
        %370 = vmatpush2.xpose.msra.mxu0 0.0
        %371 = vmatprep.subr.mxu0 0.0
        %372 = vmatpush2.xpose.msra.mxu0 0.0
        %373 = vmatprep.subr.mxu0 0.0
        %374 = vmatpush2.xpose.msra.mxu0 0.0
        %375 = vmatprep.subr.mxu0 0.0
        %376 = vmatpush2.xpose.msra.mxu0 0.0
        %377 = vmatprep.subr.mxu0 0.0
        %378 = vmatpush2.xpose.msra.mxu0 0.0
        %379 = vmatprep.subr.mxu0 0.0
        %380 = vmatpush2.xpose.msra.mxu0 0.0
        %381 = vmatprep.subr.mxu0 0.0
        %382 = vmatpush2.xpose.msra.mxu0 0.0
        %383 = vmatprep.subr.mxu0 0.0
        %384 = vmatpush2.xpose.msra.mxu0 0.0
        %385 = vmatprep.subr.mxu0 0.0
        %386 = vmatpush2.xpose.msra.mxu0 0.0
        %387 = vmatprep.subr.mxu0 0.0
        %388 = vmatpush2.xpose.msra.mxu0 0.0
        %389 = vmatprep.subr.mxu0 0.0
        %390 = vmatpush2.xpose.msra.mxu0 0.0
        %391 = vmatprep.subr.mxu0 0.0
        %392 = vmatpush2.xpose.msra.mxu0 0.0
        %393 = vmatprep.subr.mxu0 0.0
        %394 = vmatpush2.xpose.msra.mxu0 0.0
        %395 = vmatprep.subr.mxu0 0.0
        %396 = vmatpush2.xpose.msra.mxu0 0.0
        %397 = vmatprep.subr.mxu0 0.0
        %398 = vmatpush2.xpose.msra.mxu0 0.0
        %399 = vmatprep.subr.mxu0 0.0
        %400 = vmatpush2.xpose.msra.mxu0 0.0
        %401 = vmatprep.mubr.f32.mxu0 0.0
        %402 = vmatmul.mubr.f32.gmra.mxu0 %v329
        %v403 = vpop.f32.mrf.mxu0
        %v404 = vadd.f32 0.0, %v403
        %v405 = vpop.f32.mrf.mxu0
        %406 = vmatprep.mubr.f32.mxu0 0.0
        %407 = vmatmul.mubr.f32.gmra.mxu0 %v331
        %v408 = vpop.f32.mrf.mxu0
        %v409 = vadd.f32 0.0, %v408
        %v410 = vpop.f32.mrf.mxu0
        %411 = vdwg.mxu0
        %vm412 = vcmask 130048
        %v413 = vsel %vm412, %v404, -inf
        %414 = vmax.xlane.f32.xlu0 %v413
        %v415 = vpop.xlane.xlu0 %414
        %v416 = vsel %vm412, %v409, -inf
        %417 = vmax.xlane.f32.xlu0 %v416
        %v418 = vpop.xlane.xlu0 %417
        %v419 = vsub.f32 %v404, %v415
        %v420 = vsub.f32 %v409, %v418
        %v421 = vmul.f32 %v419, 1.442695
        %v422 = vpow.pop %v421
        %v423 = vmul.f32 %v420, 1.442695
        %v424 = vpow.pop %v423
        %v425 = vsel %vm412, %v422, 0.0
        %426 = vadd.xlane.f32.xlu0 %v425
        %v427 = vpop.xlane.xlu0 %426
        %v428 = vsel %vm412, %v424, 0.0
        %429 = vadd.xlane.f32.xlu0 %v428
        %v430 = vpop.xlane.xlu0 %429
        %v431 = vrcp.pop %v427
        %v432 = vrcp.pop %v430
        %v433 = vmul.f32 %v422, %v431
        %v434 = vmul.f32 %v424, %v432
        %435 = vrot.lane.b32.xlu0 %v320, 64
        %v436 = vpop.permute.xlu0 %435
        %437 = vrot.lane.b32.xlu0 %v321, 64
        %v438 = vpop.permute.xlu0 %437
        %v442 = vsel %vm412, %v433, 0
        %v445 = vsel %vm412, %v434, 0
        %447 = vmatprep.subr.mxu0 0.0
        %448 = vmatpush1.msra.mxu0 0.0
        %449 = vmatprep.subr.mxu0 0.0
        %450 = vmatpush1.msra.mxu0 0.0
        %451 = vmatprep.subr.mxu0 0.0
        %452 = vmatpush1.msra.mxu0 0.0
        %453 = vmatprep.subr.mxu0 0.0
        %454 = vmatpush1.msra.mxu0 0.0
        %455 = vmatprep.subr.mxu0 0.0
        %456 = vmatpush1.msra.mxu0 0.0
        %457 = vmatprep.subr.mxu0 0.0
        %458 = vmatpush1.msra.mxu0 0.0
        %459 = vmatprep.subr.mxu0 0.0
        %460 = vmatpush1.msra.mxu0 0.0
        %461 = vmatprep.subr.mxu0 0.0
        %462 = vmatpush1.msra.mxu0 0.0
        %463 = vmatprep.subr.mxu0 0.0
        %464 = vmatpush1.msra.mxu0 0.0
        %465 = vmatprep.subr.mxu0 0.0
        %466 = vmatpush1.msra.mxu0 0.0
        %467 = vmatprep.subr.mxu0 0.0
        %468 = vmatpush1.msra.mxu0 0.0
        %469 = vmatprep.subr.mxu0 0.0
        %470 = vmatpush1.msra.mxu0 0.0
        %471 = vmatprep.subr.mxu0 0.0
        %472 = vmatpush1.msra.mxu0 0.0
        %473 = vmatprep.subr.mxu0 0.0
        %474 = vmatpush1.msra.mxu0 0.0
        %475 = vmatprep.subr.mxu0 0.0
        %476 = vmatpush1.msra.mxu0 %v438
        %477 = vmatprep.subr.mxu0 0.0
        %478 = vmatpush1.msra.mxu0 %v436
        %479 = vmatprep.subr.mxu0 0.0
        %480 = vmatpush2.msra.mxu0 0.0
        %481 = vmatprep.subr.mxu0 0.0
        %482 = vmatpush2.msra.mxu0 0.0
        %483 = vmatprep.subr.mxu0 0.0
        %484 = vmatpush2.msra.mxu0 0.0
        %485 = vmatprep.subr.mxu0 0.0
        %486 = vmatpush2.msra.mxu0 0.0
        %487 = vmatprep.subr.mxu0 0.0
        %488 = vmatpush2.msra.mxu0 0.0
        %489 = vmatprep.subr.mxu0 0.0
        %490 = vmatpush2.msra.mxu0 0.0
        %491 = vmatprep.subr.mxu0 0.0
        %492 = vmatpush2.msra.mxu0 0.0
        %493 = vmatprep.subr.mxu0 0.0
        %494 = vmatpush2.msra.mxu0 0.0
        %495 = vmatprep.subr.mxu0 0.0
        %496 = vmatpush2.msra.mxu0 0.0
        %497 = vmatprep.subr.mxu0 0.0
        %498 = vmatpush2.msra.mxu0 0.0
        %499 = vmatprep.subr.mxu0 0.0
        %500 = vmatpush2.msra.mxu0 0.0
        %501 = vmatprep.subr.mxu0 0.0
        %502 = vmatpush2.msra.mxu0 0.0
        %503 = vmatprep.subr.mxu0 0.0
        %504 = vmatpush2.msra.mxu0 0.0
        %505 = vmatprep.subr.mxu0 0.0
        %506 = vmatpush2.msra.mxu0 0.0
        %507 = vmatprep.subr.mxu0 0.0
        %508 = vmatpush2.msra.mxu0 0.0
        %509 = vmatprep.subr.mxu0 0.0
        %510 = vmatpush2.msra.mxu0 0.0
        %511 = vmatprep.mubr.f32.mxu0 0.0
        %512 = vmatmul.mubr.f32.gmra.mxu0 %v442
        %v513 = vpop.f32.mrf.mxu0
        %v514 = vadd.f32 0.0, %v513
        %v515 = vpop.f32.mrf.mxu0
        %516 = vmatprep.mubr.f32.mxu0 0.0
        %517 = vmatmul.mubr.f32.gmra.mxu0 %v445
        %v518 = vpop.f32.mrf.mxu0
        %v519 = vadd.f32 0.0, %v518
        %v520 = vpop.f32.mrf.mxu0
        %521 = vdwg.mxu0
        %v522 = vld [vmem:[%s3] sm:$0xf]
        %523 = vrot.lane.b32.xlu0 %v320, 124
        %v524 = vpop.permute.xlu0 %523
        %525 = vrot.lane.b32.xlu0 %v321, 124
        %v526 = vpop.permute.xlu0 %525
        %527 = vrot.lane.b32.xlu0 %v320, 92
        %v528 = vpop.permute.xlu0 %527
        %529 = vrot.lane.b32.xlu0 %v321, 92
        %v530 = vpop.permute.xlu0 %529
        %v531 = vsel %vm328, %v524, 0
        %v533 = vsel %vm328, %v526, 0
        %v535 = vsel %vm328, %v528, 0
        %v537 = vsel %vm328, %v530, 0
        %539 = vmatprep.subr.mxu0 0.0
        %540 = vmatpush1.xpose.msra.mxu0 0.0
        %541 = vmatprep.subr.mxu0 0.0
        %542 = vmatpush1.xpose.msra.mxu0 0.0
        %543 = vmatprep.subr.mxu0 0.0
        %544 = vmatpush1.xpose.msra.mxu0 0.0
        %545 = vmatprep.subr.mxu0 0.0
        %546 = vmatpush1.xpose.msra.mxu0 0.0
        %547 = vmatprep.subr.mxu0 0.0
        %548 = vmatpush1.xpose.msra.mxu0 0.0
        %549 = vmatprep.subr.mxu0 0.0
        %550 = vmatpush1.xpose.msra.mxu0 0.0
        %551 = vmatprep.subr.mxu0 0.0
        %552 = vmatpush1.xpose.msra.mxu0 0.0
        %553 = vmatprep.subr.mxu0 0.0
        %554 = vmatpush1.xpose.msra.mxu0 0.0
        %555 = vmatprep.subr.mxu0 0.0
        %556 = vmatpush1.xpose.msra.mxu0 0.0
        %557 = vmatprep.subr.mxu0 0.0
        %558 = vmatpush1.xpose.msra.mxu0 0.0
        %559 = vmatprep.subr.mxu0 0.0
        %560 = vmatpush1.xpose.msra.mxu0 0.0
        %561 = vmatprep.subr.mxu0 0.0
        %562 = vmatpush1.xpose.msra.mxu0 0.0
        %563 = vmatprep.subr.mxu0 0.0
        %564 = vmatpush1.xpose.msra.mxu0 0.0
        %565 = vmatprep.subr.mxu0 0.0
        %566 = vmatpush1.xpose.msra.mxu0 0.0
        %567 = vmatprep.subr.mxu0 0.0
        %568 = vmatpush1.xpose.msra.mxu0 %v537
        %569 = vmatprep.subr.mxu0 0.0
        %570 = vmatpush1.xpose.msra.mxu0 %v535
        %571 = vmatprep.subr.mxu0 0.0
        %572 = vmatpush2.xpose.msra.mxu0 0.0
        %573 = vmatprep.subr.mxu0 0.0
        %574 = vmatpush2.xpose.msra.mxu0 0.0
        %575 = vmatprep.subr.mxu0 0.0
        %576 = vmatpush2.xpose.msra.mxu0 0.0
        %577 = vmatprep.subr.mxu0 0.0
        %578 = vmatpush2.xpose.msra.mxu0 0.0
        %579 = vmatprep.subr.mxu0 0.0
        %580 = vmatpush2.xpose.msra.mxu0 0.0
        %581 = vmatprep.subr.mxu0 0.0
        %582 = vmatpush2.xpose.msra.mxu0 0.0
        %583 = vmatprep.subr.mxu0 0.0
        %584 = vmatpush2.xpose.msra.mxu0 0.0
        %585 = vmatprep.subr.mxu0 0.0
        %586 = vmatpush2.xpose.msra.mxu0 0.0
        %587 = vmatprep.subr.mxu0 0.0
        %588 = vmatpush2.xpose.msra.mxu0 0.0
        %589 = vmatprep.subr.mxu0 0.0
        %590 = vmatpush2.xpose.msra.mxu0 0.0
        %591 = vmatprep.subr.mxu0 0.0
        %592 = vmatpush2.xpose.msra.mxu0 0.0
        %593 = vmatprep.subr.mxu0 0.0
        %594 = vmatpush2.xpose.msra.mxu0 0.0
        %595 = vmatprep.subr.mxu0 0.0
        %596 = vmatpush2.xpose.msra.mxu0 0.0
        %597 = vmatprep.subr.mxu0 0.0
        %598 = vmatpush2.xpose.msra.mxu0 0.0
        %599 = vmatprep.subr.mxu0 0.0
        %600 = vmatpush2.xpose.msra.mxu0 0.0
        %601 = vmatprep.subr.mxu0 0.0
        %602 = vmatpush2.xpose.msra.mxu0 0.0
        %603 = vmatprep.mubr.f32.mxu0 0.0
        %604 = vmatmul.mubr.f32.gmra.mxu0 %v531
        %v605 = vpop.f32.mrf.mxu0
        %v606 = vadd.f32 0.0, %v605
        %v607 = vpop.f32.mrf.mxu0
        %608 = vmatprep.mubr.f32.mxu0 0.0
        %609 = vmatmul.mubr.f32.gmra.mxu0 %v533
        %v610 = vpop.f32.mrf.mxu0
        %v611 = vadd.f32 0.0, %v610
        %v612 = vpop.f32.mrf.mxu0
        %613 = vdwg.mxu0
        %v614 = vsel %vm412, %v606, -inf
        %615 = vmax.xlane.f32.xlu0 %v614
        %v616 = vpop.xlane.xlu0 %615
        %v617 = vsel %vm412, %v611, -inf
        %618 = vmax.xlane.f32.xlu0 %v617
        %v619 = vpop.xlane.xlu0 %618
        %v620 = vsub.f32 %v606, %v616
        %v621 = vsub.f32 %v611, %v619
        %v622 = vmul.f32 %v620, 1.442695
        %v623 = vpow.pop %v622
        %v624 = vmul.f32 %v621, 1.442695
        %v625 = vpow.pop %v624
        %v626 = vsel %vm412, %v623, 0.0
        %627 = vadd.xlane.f32.xlu0 %v626
        %v628 = vpop.xlane.xlu0 %627
        %v629 = vsel %vm412, %v625, 0.0
        %630 = vadd.xlane.f32.xlu0 %v629
        %v631 = vpop.xlane.xlu0 %630
        %v632 = vrcp.pop %v628
        %v633 = vrcp.pop %v631
        %v634 = vmul.f32 %v623, %v632
        %v635 = vmul.f32 %v625, %v633
        %636 = vrot.lane.b32.xlu0 %v320, 60
        %v637 = vpop.permute.xlu0 %636
        %638 = vrot.lane.b32.xlu0 %v321, 60
        %v639 = vpop.permute.xlu0 %638
        %v643 = vsel %vm412, %v634, 0
        %v646 = vsel %vm412, %v635, 0
        %648 = vmatprep.subr.mxu0 0.0
        %649 = vmatpush1.msra.mxu0 0.0
        %650 = vmatprep.subr.mxu0 0.0
        %651 = vmatpush1.msra.mxu0 0.0
        %652 = vmatprep.subr.mxu0 0.0
        %653 = vmatpush1.msra.mxu0 0.0
        %654 = vmatprep.subr.mxu0 0.0
        %655 = vmatpush1.msra.mxu0 0.0
        %656 = vmatprep.subr.mxu0 0.0
        %657 = vmatpush1.msra.mxu0 0.0
        %658 = vmatprep.subr.mxu0 0.0
        %659 = vmatpush1.msra.mxu0 0.0
        %660 = vmatprep.subr.mxu0 0.0
        %661 = vmatpush1.msra.mxu0 0.0
        %662 = vmatprep.subr.mxu0 0.0
        %663 = vmatpush1.msra.mxu0 0.0
        %664 = vmatprep.subr.mxu0 0.0
        %665 = vmatpush1.msra.mxu0 0.0
        %666 = vmatprep.subr.mxu0 0.0
        %667 = vmatpush1.msra.mxu0 0.0
        %668 = vmatprep.subr.mxu0 0.0
        %669 = vmatpush1.msra.mxu0 0.0
        %670 = vmatprep.subr.mxu0 0.0
        %671 = vmatpush1.msra.mxu0 0.0
        %672 = vmatprep.subr.mxu0 0.0
        %673 = vmatpush1.msra.mxu0 0.0
        %674 = vmatprep.subr.mxu0 0.0
        %675 = vmatpush1.msra.mxu0 0.0
        %676 = vmatprep.subr.mxu0 0.0
        %677 = vmatpush1.msra.mxu0 %v639
        %678 = vmatprep.subr.mxu0 0.0
        %679 = vmatpush1.msra.mxu0 %v637
        %680 = vmatprep.subr.mxu0 0.0
        %681 = vmatpush2.msra.mxu0 0.0
        %682 = vmatprep.subr.mxu0 0.0
        %683 = vmatpush2.msra.mxu0 0.0
        %684 = vmatprep.subr.mxu0 0.0
        %685 = vmatpush2.msra.mxu0 0.0
        %686 = vmatprep.subr.mxu0 0.0
        %687 = vmatpush2.msra.mxu0 0.0
        %688 = vmatprep.subr.mxu0 0.0
        %689 = vmatpush2.msra.mxu0 0.0
        %690 = vmatprep.subr.mxu0 0.0
        %691 = vmatpush2.msra.mxu0 0.0
        %692 = vmatprep.subr.mxu0 0.0
        %693 = vmatpush2.msra.mxu0 0.0
        %694 = vmatprep.subr.mxu0 0.0
        %695 = vmatpush2.msra.mxu0 0.0
        %696 = vmatprep.subr.mxu0 0.0
        %697 = vmatpush2.msra.mxu0 0.0
        %698 = vmatprep.subr.mxu0 0.0
        %699 = vmatpush2.msra.mxu0 0.0
        %700 = vmatprep.subr.mxu0 0.0
        %701 = vmatpush2.msra.mxu0 0.0
        %702 = vmatprep.subr.mxu0 0.0
        %703 = vmatpush2.msra.mxu0 0.0
        %704 = vmatprep.subr.mxu0 0.0
        %705 = vmatpush2.msra.mxu0 0.0
        %706 = vmatprep.subr.mxu0 0.0
        %707 = vmatpush2.msra.mxu0 0.0
        %708 = vmatprep.subr.mxu0 0.0
        %709 = vmatpush2.msra.mxu0 0.0
        %710 = vmatprep.subr.mxu0 0.0
        %711 = vmatpush2.msra.mxu0 0.0
        %712 = vmatprep.mubr.f32.mxu0 0.0
        %713 = vmatmul.mubr.f32.gmra.mxu0 %v643
        %v714 = vpop.f32.mrf.mxu0
        %v715 = vadd.f32 0.0, %v714
        %v716 = vpop.f32.mrf.mxu0
        %717 = vmatprep.mubr.f32.mxu0 0.0
        %718 = vmatmul.mubr.f32.gmra.mxu0 %v646
        %v719 = vpop.f32.mrf.mxu0
        %v720 = vadd.f32 0.0, %v719
        %v721 = vpop.f32.mrf.mxu0
        %722 = vdwg.mxu0
        %v723 = vld [vmem:[%s3 + $0x4] sm:$0xf]
        %v725 = vsel %vm328, %v715, 0
        %v728 = vsel %vm328, %v720, 0
        %vm730 = vcmask 1043456
        %v732 = vsel %vm730, %v723, 0
        %734 = vmatprep.subr.mxu0 0.0
        %735 = vmatpush1.msra.mxu0 0.0
        %736 = vmatprep.subr.mxu0 0.0
        %737 = vmatpush1.msra.mxu0 0.0
        %738 = vmatprep.subr.mxu0 0.0
        %739 = vmatpush1.msra.mxu0 0.0
        %740 = vmatprep.subr.mxu0 0.0
        %741 = vmatpush1.msra.mxu0 0.0
        %742 = vmatprep.subr.mxu0 0.0
        %743 = vmatpush1.msra.mxu0 0.0
        %744 = vmatprep.subr.mxu0 0.0
        %745 = vmatpush1.msra.mxu0 0.0
        %746 = vmatprep.subr.mxu0 0.0
        %747 = vmatpush1.msra.mxu0 0.0
        %748 = vmatprep.subr.mxu0 0.0
        %749 = vmatpush1.msra.mxu0 0.0
        %750 = vmatprep.subr.mxu0 0.0
        %751 = vmatpush1.msra.mxu0 0.0
        %752 = vmatprep.subr.mxu0 0.0
        %753 = vmatpush1.msra.mxu0 0.0
        %754 = vmatprep.subr.mxu0 0.0
        %755 = vmatpush1.msra.mxu0 0.0
        %756 = vmatprep.subr.mxu0 0.0
        %757 = vmatpush1.msra.mxu0 0.0
        %758 = vmatprep.subr.mxu0 0.0
        %759 = vmatpush1.msra.mxu0 0.0
        %760 = vmatprep.subr.mxu0 0.0
        %761 = vmatpush1.msra.mxu0 0.0
        %762 = vmatprep.subr.mxu0 0.0
        %763 = vmatpush1.msra.mxu0 0.0
        %764 = vmatprep.subr.mxu0 0.0
        %765 = vmatpush1.msra.mxu0 %v732
        %766 = vmatprep.subr.mxu0 0.0
        %767 = vmatpush2.msra.mxu0 0.0
        %768 = vmatprep.subr.mxu0 0.0
        %769 = vmatpush2.msra.mxu0 0.0
        %770 = vmatprep.subr.mxu0 0.0
        %771 = vmatpush2.msra.mxu0 0.0
        %772 = vmatprep.subr.mxu0 0.0
        %773 = vmatpush2.msra.mxu0 0.0
        %774 = vmatprep.subr.mxu0 0.0
        %775 = vmatpush2.msra.mxu0 0.0
        %776 = vmatprep.subr.mxu0 0.0
        %777 = vmatpush2.msra.mxu0 0.0
        %778 = vmatprep.subr.mxu0 0.0
        %779 = vmatpush2.msra.mxu0 0.0
        %780 = vmatprep.subr.mxu0 0.0
        %781 = vmatpush2.msra.mxu0 0.0
        %782 = vmatprep.subr.mxu0 0.0
        %783 = vmatpush2.msra.mxu0 0.0
        %784 = vmatprep.subr.mxu0 0.0
        %785 = vmatpush2.msra.mxu0 0.0
        %786 = vmatprep.subr.mxu0 0.0
        %787 = vmatpush2.msra.mxu0 0.0
        %788 = vmatprep.subr.mxu0 0.0
        %789 = vmatpush2.msra.mxu0 0.0
        %790 = vmatprep.subr.mxu0 0.0
        %791 = vmatpush2.msra.mxu0 0.0
        %792 = vmatprep.subr.mxu0 0.0
        %793 = vmatpush2.msra.mxu0 0.0
        %794 = vmatprep.subr.mxu0 0.0
        %795 = vmatpush2.msra.mxu0 0.0
        %796 = vmatprep.subr.mxu0 0.0
        %797 = vmatpush2.msra.mxu0 0.0
        %798 = vmatprep.mubr.f32.mxu0 0.0
        %799 = vmatmul.mubr.f32.gmra.mxu0 %v725
        %v800 = vpop.f32.mrf.mxu0
        %v801 = vadd.f32 0.0, %v800
        %v802 = vpop.f32.mrf.mxu0
        %803 = vmatprep.mubr.f32.mxu0 0.0
        %804 = vmatmul.mubr.f32.gmra.mxu0 %v728
        %v805 = vpop.f32.mrf.mxu0
        %v806 = vadd.f32 0.0, %v805
        %v807 = vpop.f32.mrf.mxu0
        %808 = vdwg.mxu0
        %v810 = vsel %vm328, %v514, 0
        %v813 = vsel %vm328, %v519, 0
        %v816 = vsel %vm730, %v522, 0
        %818 = vmatprep.subr.mxu0 0.0
        %819 = vmatpush1.msra.mxu0 0.0
        %820 = vmatprep.subr.mxu0 0.0
        %821 = vmatpush1.msra.mxu0 0.0
        %822 = vmatprep.subr.mxu0 0.0
        %823 = vmatpush1.msra.mxu0 0.0
        %824 = vmatprep.subr.mxu0 0.0
        %825 = vmatpush1.msra.mxu0 0.0
        %826 = vmatprep.subr.mxu0 0.0
        %827 = vmatpush1.msra.mxu0 0.0
        %828 = vmatprep.subr.mxu0 0.0
        %829 = vmatpush1.msra.mxu0 0.0
        %830 = vmatprep.subr.mxu0 0.0
        %831 = vmatpush1.msra.mxu0 0.0
        %832 = vmatprep.subr.mxu0 0.0
        %833 = vmatpush1.msra.mxu0 0.0
        %834 = vmatprep.subr.mxu0 0.0
        %835 = vmatpush1.msra.mxu0 0.0
        %836 = vmatprep.subr.mxu0 0.0
        %837 = vmatpush1.msra.mxu0 0.0
        %838 = vmatprep.subr.mxu0 0.0
        %839 = vmatpush1.msra.mxu0 0.0
        %840 = vmatprep.subr.mxu0 0.0
        %841 = vmatpush1.msra.mxu0 0.0
        %842 = vmatprep.subr.mxu0 0.0
        %843 = vmatpush1.msra.mxu0 0.0
        %844 = vmatprep.subr.mxu0 0.0
        %845 = vmatpush1.msra.mxu0 0.0
        %846 = vmatprep.subr.mxu0 0.0
        %847 = vmatpush1.msra.mxu0 0.0
        %848 = vmatprep.subr.mxu0 0.0
        %849 = vmatpush1.msra.mxu0 %v816
        %850 = vmatprep.subr.mxu0 0.0
        %851 = vmatpush2.msra.mxu0 0.0
        %852 = vmatprep.subr.mxu0 0.0
        %853 = vmatpush2.msra.mxu0 0.0
        %854 = vmatprep.subr.mxu0 0.0
        %855 = vmatpush2.msra.mxu0 0.0
        %856 = vmatprep.subr.mxu0 0.0
        %857 = vmatpush2.msra.mxu0 0.0
        %858 = vmatprep.subr.mxu0 0.0
        %859 = vmatpush2.msra.mxu0 0.0
        %860 = vmatprep.subr.mxu0 0.0
        %861 = vmatpush2.msra.mxu0 0.0
        %862 = vmatprep.subr.mxu0 0.0
        %863 = vmatpush2.msra.mxu0 0.0
        %864 = vmatprep.subr.mxu0 0.0
        %865 = vmatpush2.msra.mxu0 0.0
        %866 = vmatprep.subr.mxu0 0.0
        %867 = vmatpush2.msra.mxu0 0.0
        %868 = vmatprep.subr.mxu0 0.0
        %869 = vmatpush2.msra.mxu0 0.0
        %870 = vmatprep.subr.mxu0 0.0
        %871 = vmatpush2.msra.mxu0 0.0
        %872 = vmatprep.subr.mxu0 0.0
        %873 = vmatpush2.msra.mxu0 0.0
        %874 = vmatprep.subr.mxu0 0.0
        %875 = vmatpush2.msra.mxu0 0.0
        %876 = vmatprep.subr.mxu0 0.0
        %877 = vmatpush2.msra.mxu0 0.0
        %878 = vmatprep.subr.mxu0 0.0
        %879 = vmatpush2.msra.mxu0 0.0
        %880 = vmatprep.subr.mxu0 0.0
        %881 = vmatpush2.msra.mxu0 0.0
        %882 = vmatprep.mubr.f32.mxu0 0.0
        %883 = vmatmul.mubr.f32.gmra.mxu0 %v810
        %v884 = vpop.f32.mrf.mxu0
        %v885 = vadd.f32 %v801, %v884
        %v886 = vpop.f32.mrf.mxu0
        %887 = vmatprep.mubr.f32.mxu0 0.0
        %888 = vmatmul.mubr.f32.gmra.mxu0 %v813
        %v889 = vpop.f32.mrf.mxu0
        %v890 = vadd.f32 %v806, %v889
        %v891 = vpop.f32.mrf.mxu0
        %892 = vdwg.mxu0
        %893 = vrot.lane.b32.xlu0 %v320, 120
        %v894 = vpop.permute.xlu0 %893
        %895 = vrot.lane.b32.xlu0 %v321, 120
        %v896 = vpop.permute.xlu0 %895
        %897 = vrot.lane.b32.xlu0 %v320, 88
        %v898 = vpop.permute.xlu0 %897
        %899 = vrot.lane.b32.xlu0 %v321, 88
        %v900 = vpop.permute.xlu0 %899
        %v901 = vsel %vm328, %v894, 0
        %v903 = vsel %vm328, %v896, 0
        %v905 = vsel %vm328, %v898, 0
        %v907 = vsel %vm328, %v900, 0
        %909 = vmatprep.subr.mxu0 0.0
        %910 = vmatpush1.xpose.msra.mxu0 0.0
        %911 = vmatprep.subr.mxu0 0.0
        %912 = vmatpush1.xpose.msra.mxu0 0.0
        %913 = vmatprep.subr.mxu0 0.0
        %914 = vmatpush1.xpose.msra.mxu0 0.0
        %915 = vmatprep.subr.mxu0 0.0
        %916 = vmatpush1.xpose.msra.mxu0 0.0
        %917 = vmatprep.subr.mxu0 0.0
        %918 = vmatpush1.xpose.msra.mxu0 0.0
        %919 = vmatprep.subr.mxu0 0.0
        %920 = vmatpush1.xpose.msra.mxu0 0.0
        %921 = vmatprep.subr.mxu0 0.0
        %922 = vmatpush1.xpose.msra.mxu0 0.0
        %923 = vmatprep.subr.mxu0 0.0
        %924 = vmatpush1.xpose.msra.mxu0 0.0
        %925 = vmatprep.subr.mxu0 0.0
        %926 = vmatpush1.xpose.msra.mxu0 0.0
        %927 = vmatprep.subr.mxu0 0.0
        %928 = vmatpush1.xpose.msra.mxu0 0.0
        %929 = vmatprep.subr.mxu0 0.0
        %930 = vmatpush1.xpose.msra.mxu0 0.0
        %931 = vmatprep.subr.mxu0 0.0
        %932 = vmatpush1.xpose.msra.mxu0 0.0
        %933 = vmatprep.subr.mxu0 0.0
        %934 = vmatpush1.xpose.msra.mxu0 0.0
        %935 = vmatprep.subr.mxu0 0.0
        %936 = vmatpush1.xpose.msra.mxu0 0.0
        %937 = vmatprep.subr.mxu0 0.0
        %938 = vmatpush1.xpose.msra.mxu0 %v907
        %939 = vmatprep.subr.mxu0 0.0
        %940 = vmatpush1.xpose.msra.mxu0 %v905
        %941 = vmatprep.subr.mxu0 0.0
        %942 = vmatpush2.xpose.msra.mxu0 0.0
        %943 = vmatprep.subr.mxu0 0.0
        %944 = vmatpush2.xpose.msra.mxu0 0.0
        %945 = vmatprep.subr.mxu0 0.0
        %946 = vmatpush2.xpose.msra.mxu0 0.0
        %947 = vmatprep.subr.mxu0 0.0
        %948 = vmatpush2.xpose.msra.mxu0 0.0
        %949 = vmatprep.subr.mxu0 0.0
        %950 = vmatpush2.xpose.msra.mxu0 0.0
        %951 = vmatprep.subr.mxu0 0.0
        %952 = vmatpush2.xpose.msra.mxu0 0.0
        %953 = vmatprep.subr.mxu0 0.0
        %954 = vmatpush2.xpose.msra.mxu0 0.0
        %955 = vmatprep.subr.mxu0 0.0
        %956 = vmatpush2.xpose.msra.mxu0 0.0
        %957 = vmatprep.subr.mxu0 0.0
        %958 = vmatpush2.xpose.msra.mxu0 0.0
        %959 = vmatprep.subr.mxu0 0.0
        %960 = vmatpush2.xpose.msra.mxu0 0.0
        %961 = vmatprep.subr.mxu0 0.0
        %962 = vmatpush2.xpose.msra.mxu0 0.0
        %963 = vmatprep.subr.mxu0 0.0
        %964 = vmatpush2.xpose.msra.mxu0 0.0
        %965 = vmatprep.subr.mxu0 0.0
        %966 = vmatpush2.xpose.msra.mxu0 0.0
        %967 = vmatprep.subr.mxu0 0.0
        %968 = vmatpush2.xpose.msra.mxu0 0.0
        %969 = vmatprep.subr.mxu0 0.0
        %970 = vmatpush2.xpose.msra.mxu0 0.0
        %971 = vmatprep.subr.mxu0 0.0
        %972 = vmatpush2.xpose.msra.mxu0 0.0
        %973 = vmatprep.mubr.f32.mxu0 0.0
        %974 = vmatmul.mubr.f32.gmra.mxu0 %v901
        %v975 = vpop.f32.mrf.mxu0
        %v976 = vadd.f32 0.0, %v975
        %v977 = vpop.f32.mrf.mxu0
        %978 = vmatprep.mubr.f32.mxu0 0.0
        %979 = vmatmul.mubr.f32.gmra.mxu0 %v903
        %v980 = vpop.f32.mrf.mxu0
        %v981 = vadd.f32 0.0, %v980
        %v982 = vpop.f32.mrf.mxu0
        %983 = vdwg.mxu0
        %v984 = vsel %vm412, %v976, -inf
        %985 = vmax.xlane.f32.xlu0 %v984
        %v986 = vpop.xlane.xlu0 %985
        %v987 = vsel %vm412, %v981, -inf
        %988 = vmax.xlane.f32.xlu0 %v987
        %v989 = vpop.xlane.xlu0 %988
        %v990 = vsub.f32 %v976, %v986
        %v991 = vsub.f32 %v981, %v989
        %v992 = vmul.f32 %v990, 1.442695
        %v993 = vpow.pop %v992
        %v994 = vmul.f32 %v991, 1.442695
        %v995 = vpow.pop %v994
        %v996 = vsel %vm412, %v993, 0.0
        %997 = vadd.xlane.f32.xlu0 %v996
        %v998 = vpop.xlane.xlu0 %997
        %v999 = vsel %vm412, %v995, 0.0
        %1000 = vadd.xlane.f32.xlu0 %v999
        %v1001 = vpop.xlane.xlu0 %1000
        %v1002 = vrcp.pop %v998
        %v1003 = vrcp.pop %v1001
        %v1004 = vmul.f32 %v993, %v1002
        %v1005 = vmul.f32 %v995, %v1003
        %1006 = vrot.lane.b32.xlu0 %v320, 56
        %v1007 = vpop.permute.xlu0 %1006
        %1008 = vrot.lane.b32.xlu0 %v321, 56
        %v1009 = vpop.permute.xlu0 %1008
        %v1013 = vsel %vm412, %v1004, 0
        %v1016 = vsel %vm412, %v1005, 0
        %1018 = vmatprep.subr.mxu0 0.0
        %1019 = vmatpush1.msra.mxu0 0.0
        %1020 = vmatprep.subr.mxu0 0.0
        %1021 = vmatpush1.msra.mxu0 0.0
        %1022 = vmatprep.subr.mxu0 0.0
        %1023 = vmatpush1.msra.mxu0 0.0
        %1024 = vmatprep.subr.mxu0 0.0
        %1025 = vmatpush1.msra.mxu0 0.0
        %1026 = vmatprep.subr.mxu0 0.0
        %1027 = vmatpush1.msra.mxu0 0.0
        %1028 = vmatprep.subr.mxu0 0.0
        %1029 = vmatpush1.msra.mxu0 0.0
        %1030 = vmatprep.subr.mxu0 0.0
        %1031 = vmatpush1.msra.mxu0 0.0
        %1032 = vmatprep.subr.mxu0 0.0
        %1033 = vmatpush1.msra.mxu0 0.0
        %1034 = vmatprep.subr.mxu0 0.0
        %1035 = vmatpush1.msra.mxu0 0.0
        %1036 = vmatprep.subr.mxu0 0.0
        %1037 = vmatpush1.msra.mxu0 0.0
        %1038 = vmatprep.subr.mxu0 0.0
        %1039 = vmatpush1.msra.mxu0 0.0
        %1040 = vmatprep.subr.mxu0 0.0
        %1041 = vmatpush1.msra.mxu0 0.0
        %1042 = vmatprep.subr.mxu0 0.0
        %1043 = vmatpush1.msra.mxu0 0.0
        %1044 = vmatprep.subr.mxu0 0.0
        %1045 = vmatpush1.msra.mxu0 0.0
        %1046 = vmatprep.subr.mxu0 0.0
        %1047 = vmatpush1.msra.mxu0 %v1009
        %1048 = vmatprep.subr.mxu0 0.0
        %1049 = vmatpush1.msra.mxu0 %v1007
        %1050 = vmatprep.subr.mxu0 0.0
        %1051 = vmatpush2.msra.mxu0 0.0
        %1052 = vmatprep.subr.mxu0 0.0
        %1053 = vmatpush2.msra.mxu0 0.0
        %1054 = vmatprep.subr.mxu0 0.0
        %1055 = vmatpush2.msra.mxu0 0.0
        %1056 = vmatprep.subr.mxu0 0.0
        %1057 = vmatpush2.msra.mxu0 0.0
        %1058 = vmatprep.subr.mxu0 0.0
        %1059 = vmatpush2.msra.mxu0 0.0
        %1060 = vmatprep.subr.mxu0 0.0
        %1061 = vmatpush2.msra.mxu0 0.0
        %1062 = vmatprep.subr.mxu0 0.0
        %1063 = vmatpush2.msra.mxu0 0.0
        %1064 = vmatprep.subr.mxu0 0.0
        %1065 = vmatpush2.msra.mxu0 0.0
        %1066 = vmatprep.subr.mxu0 0.0
        %1067 = vmatpush2.msra.mxu0 0.0
        %1068 = vmatprep.subr.mxu0 0.0
        %1069 = vmatpush2.msra.mxu0 0.0
        %1070 = vmatprep.subr.mxu0 0.0
        %1071 = vmatpush2.msra.mxu0 0.0
        %1072 = vmatprep.subr.mxu0 0.0
        %1073 = vmatpush2.msra.mxu0 0.0
        %1074 = vmatprep.subr.mxu0 0.0
        %1075 = vmatpush2.msra.mxu0 0.0
        %1076 = vmatprep.subr.mxu0 0.0
        %1077 = vmatpush2.msra.mxu0 0.0
        %1078 = vmatprep.subr.mxu0 0.0
        %1079 = vmatpush2.msra.mxu0 0.0
        %1080 = vmatprep.subr.mxu0 0.0
        %1081 = vmatpush2.msra.mxu0 0.0
        %1082 = vmatprep.mubr.f32.mxu0 0.0
        %1083 = vmatmul.mubr.f32.gmra.mxu0 %v1013
        %v1084 = vpop.f32.mrf.mxu0
        %v1085 = vadd.f32 0.0, %v1084
        %v1086 = vpop.f32.mrf.mxu0
        %1087 = vmatprep.mubr.f32.mxu0 0.0
        %1088 = vmatmul.mubr.f32.gmra.mxu0 %v1016
        %v1089 = vpop.f32.mrf.mxu0
        %v1090 = vadd.f32 0.0, %v1089
        %v1091 = vpop.f32.mrf.mxu0
        %1092 = vdwg.mxu0
        %v1093 = vld [vmem:[%s3 + $0x8] sm:$0xf]
        %v1095 = vsel %vm328, %v1085, 0
        %v1098 = vsel %vm328, %v1090, 0
        %v1101 = vsel %vm730, %v1093, 0
        %1103 = vmatprep.subr.mxu0 0.0
        %1104 = vmatpush1.msra.mxu0 0.0
        %1105 = vmatprep.subr.mxu0 0.0
        %1106 = vmatpush1.msra.mxu0 0.0
        %1107 = vmatprep.subr.mxu0 0.0
        %1108 = vmatpush1.msra.mxu0 0.0
        %1109 = vmatprep.subr.mxu0 0.0
        %1110 = vmatpush1.msra.mxu0 0.0
        %1111 = vmatprep.subr.mxu0 0.0
        %1112 = vmatpush1.msra.mxu0 0.0
        %1113 = vmatprep.subr.mxu0 0.0
        %1114 = vmatpush1.msra.mxu0 0.0
        %1115 = vmatprep.subr.mxu0 0.0
        %1116 = vmatpush1.msra.mxu0 0.0
        %1117 = vmatprep.subr.mxu0 0.0
        %1118 = vmatpush1.msra.mxu0 0.0
        %1119 = vmatprep.subr.mxu0 0.0
        %1120 = vmatpush1.msra.mxu0 0.0
        %1121 = vmatprep.subr.mxu0 0.0
        %1122 = vmatpush1.msra.mxu0 0.0
        %1123 = vmatprep.subr.mxu0 0.0
        %1124 = vmatpush1.msra.mxu0 0.0
        %1125 = vmatprep.subr.mxu0 0.0
        %1126 = vmatpush1.msra.mxu0 0.0
        %1127 = vmatprep.subr.mxu0 0.0
        %1128 = vmatpush1.msra.mxu0 0.0
        %1129 = vmatprep.subr.mxu0 0.0
        %1130 = vmatpush1.msra.mxu0 0.0
        %1131 = vmatprep.subr.mxu0 0.0
        %1132 = vmatpush1.msra.mxu0 0.0
        %1133 = vmatprep.subr.mxu0 0.0
        %1134 = vmatpush1.msra.mxu0 %v1101
        %1135 = vmatprep.subr.mxu0 0.0
        %1136 = vmatpush2.msra.mxu0 0.0
        %1137 = vmatprep.subr.mxu0 0.0
        %1138 = vmatpush2.msra.mxu0 0.0
        %1139 = vmatprep.subr.mxu0 0.0
        %1140 = vmatpush2.msra.mxu0 0.0
        %1141 = vmatprep.subr.mxu0 0.0
        %1142 = vmatpush2.msra.mxu0 0.0
        %1143 = vmatprep.subr.mxu0 0.0
        %1144 = vmatpush2.msra.mxu0 0.0
        %1145 = vmatprep.subr.mxu0 0.0
        %1146 = vmatpush2.msra.mxu0 0.0
        %1147 = vmatprep.subr.mxu0 0.0
        %1148 = vmatpush2.msra.mxu0 0.0
        %1149 = vmatprep.subr.mxu0 0.0
        %1150 = vmatpush2.msra.mxu0 0.0
        %1151 = vmatprep.subr.mxu0 0.0
        %1152 = vmatpush2.msra.mxu0 0.0
        %1153 = vmatprep.subr.mxu0 0.0
        %1154 = vmatpush2.msra.mxu0 0.0
        %1155 = vmatprep.subr.mxu0 0.0
        %1156 = vmatpush2.msra.mxu0 0.0
        %1157 = vmatprep.subr.mxu0 0.0
        %1158 = vmatpush2.msra.mxu0 0.0
        %1159 = vmatprep.subr.mxu0 0.0
        %1160 = vmatpush2.msra.mxu0 0.0
        %1161 = vmatprep.subr.mxu0 0.0
        %1162 = vmatpush2.msra.mxu0 0.0
        %1163 = vmatprep.subr.mxu0 0.0
        %1164 = vmatpush2.msra.mxu0 0.0
        %1165 = vmatprep.subr.mxu0 0.0
        %1166 = vmatpush2.msra.mxu0 0.0
        %1167 = vmatprep.mubr.f32.mxu0 0.0
        %1168 = vmatmul.mubr.f32.gmra.mxu0 %v1095
        %v1169 = vpop.f32.mrf.mxu0
        %v1170 = vadd.f32 0.0, %v1169
        %v1171 = vpop.f32.mrf.mxu0
        %1172 = vmatprep.mubr.f32.mxu0 0.0
        %1173 = vmatmul.mubr.f32.gmra.mxu0 %v1098
        %v1174 = vpop.f32.mrf.mxu0
        %v1175 = vadd.f32 0.0, %v1174
        %v1176 = vpop.f32.mrf.mxu0
        %1177 = vdwg.mxu0
        %v1178 = vadd.f32 %v885, %v1170
        %v1179 = vadd.f32 %v890, %v1175
        %1180 = vrot.lane.b32.xlu0 %v320, 116
        %v1181 = vpop.permute.xlu0 %1180
        %1182 = vrot.lane.b32.xlu0 %v321, 116
        %v1183 = vpop.permute.xlu0 %1182
        %1184 = vrot.lane.b32.xlu0 %v320, 84
        %v1185 = vpop.permute.xlu0 %1184
        %1186 = vrot.lane.b32.xlu0 %v321, 84
        %v1187 = vpop.permute.xlu0 %1186
        %v1188 = vsel %vm328, %v1181, 0
        %v1190 = vsel %vm328, %v1183, 0
        %v1192 = vsel %vm328, %v1185, 0
        %v1194 = vsel %vm328, %v1187, 0
        %1196 = vmatprep.subr.mxu0 0.0
        %1197 = vmatpush1.xpose.msra.mxu0 0.0
        %1198 = vmatprep.subr.mxu0 0.0
        %1199 = vmatpush1.xpose.msra.mxu0 0.0
        %1200 = vmatprep.subr.mxu0 0.0
        %1201 = vmatpush1.xpose.msra.mxu0 0.0
        %1202 = vmatprep.subr.mxu0 0.0
        %1203 = vmatpush1.xpose.msra.mxu0 0.0
        %1204 = vmatprep.subr.mxu0 0.0
        %1205 = vmatpush1.xpose.msra.mxu0 0.0
        %1206 = vmatprep.subr.mxu0 0.0
        %1207 = vmatpush1.xpose.msra.mxu0 0.0
        %1208 = vmatprep.subr.mxu0 0.0
        %1209 = vmatpush1.xpose.msra.mxu0 0.0
        %1210 = vmatprep.subr.mxu0 0.0
        %1211 = vmatpush1.xpose.msra.mxu0 0.0
        %1212 = vmatprep.subr.mxu0 0.0
        %1213 = vmatpush1.xpose.msra.mxu0 0.0
        %1214 = vmatprep.subr.mxu0 0.0
        %1215 = vmatpush1.xpose.msra.mxu0 0.0
        %1216 = vmatprep.subr.mxu0 0.0
        %1217 = vmatpush1.xpose.msra.mxu0 0.0
        %1218 = vmatprep.subr.mxu0 0.0
        %1219 = vmatpush1.xpose.msra.mxu0 0.0
        %1220 = vmatprep.subr.mxu0 0.0
        %1221 = vmatpush1.xpose.msra.mxu0 0.0
        %1222 = vmatprep.subr.mxu0 0.0
        %1223 = vmatpush1.xpose.msra.mxu0 0.0
        %1224 = vmatprep.subr.mxu0 0.0
        %1225 = vmatpush1.xpose.msra.mxu0 %v1194
        %1226 = vmatprep.subr.mxu0 0.0
        %1227 = vmatpush1.xpose.msra.mxu0 %v1192
        %1228 = vmatprep.subr.mxu0 0.0
        %1229 = vmatpush2.xpose.msra.mxu0 0.0
        %1230 = vmatprep.subr.mxu0 0.0
        %1231 = vmatpush2.xpose.msra.mxu0 0.0
        %1232 = vmatprep.subr.mxu0 0.0
        %1233 = vmatpush2.xpose.msra.mxu0 0.0
        %1234 = vmatprep.subr.mxu0 0.0
        %1235 = vmatpush2.xpose.msra.mxu0 0.0
        %1236 = vmatprep.subr.mxu0 0.0
        %1237 = vmatpush2.xpose.msra.mxu0 0.0
        %1238 = vmatprep.subr.mxu0 0.0
        %1239 = vmatpush2.xpose.msra.mxu0 0.0
        %1240 = vmatprep.subr.mxu0 0.0
        %1241 = vmatpush2.xpose.msra.mxu0 0.0
        %1242 = vmatprep.subr.mxu0 0.0
        %1243 = vmatpush2.xpose.msra.mxu0 0.0
        %1244 = vmatprep.subr.mxu0 0.0
        %1245 = vmatpush2.xpose.msra.mxu0 0.0
        %1246 = vmatprep.subr.mxu0 0.0
        %1247 = vmatpush2.xpose.msra.mxu0 0.0
        %1248 = vmatprep.subr.mxu0 0.0
        %1249 = vmatpush2.xpose.msra.mxu0 0.0
        %1250 = vmatprep.subr.mxu0 0.0
        %1251 = vmatpush2.xpose.msra.mxu0 0.0
        %1252 = vmatprep.subr.mxu0 0.0
        %1253 = vmatpush2.xpose.msra.mxu0 0.0
        %1254 = vmatprep.subr.mxu0 0.0
        %1255 = vmatpush2.xpose.msra.mxu0 0.0
        %1256 = vmatprep.subr.mxu0 0.0
        %1257 = vmatpush2.xpose.msra.mxu0 0.0
        %1258 = vmatprep.subr.mxu0 0.0
        %1259 = vmatpush2.xpose.msra.mxu0 0.0
        %1260 = vmatprep.mubr.f32.mxu0 0.0
        %1261 = vmatmul.mubr.f32.gmra.mxu0 %v1188
        %v1262 = vpop.f32.mrf.mxu0
        %v1263 = vadd.f32 0.0, %v1262
        %v1264 = vpop.f32.mrf.mxu0
        %1265 = vmatprep.mubr.f32.mxu0 0.0
        %1266 = vmatmul.mubr.f32.gmra.mxu0 %v1190
        %v1267 = vpop.f32.mrf.mxu0
        %v1268 = vadd.f32 0.0, %v1267
        %v1269 = vpop.f32.mrf.mxu0
        %1270 = vdwg.mxu0
        %v1271 = vsel %vm412, %v1263, -inf
        %1272 = vmax.xlane.f32.xlu0 %v1271
        %v1273 = vpop.xlane.xlu0 %1272
        %v1274 = vsel %vm412, %v1268, -inf
        %1275 = vmax.xlane.f32.xlu0 %v1274
        %v1276 = vpop.xlane.xlu0 %1275
        %v1277 = vsub.f32 %v1263, %v1273
        %v1278 = vsub.f32 %v1268, %v1276
        %v1279 = vmul.f32 %v1277, 1.442695
        %v1280 = vpow.pop %v1279
        %v1281 = vmul.f32 %v1278, 1.442695
        %v1282 = vpow.pop %v1281
        %v1283 = vsel %vm412, %v1280, 0.0
        %1284 = vadd.xlane.f32.xlu0 %v1283
        %v1285 = vpop.xlane.xlu0 %1284
        %v1286 = vsel %vm412, %v1282, 0.0
        %1287 = vadd.xlane.f32.xlu0 %v1286
        %v1288 = vpop.xlane.xlu0 %1287
        %v1289 = vrcp.pop %v1285
        %v1290 = vrcp.pop %v1288
        %v1291 = vmul.f32 %v1280, %v1289
        %v1292 = vmul.f32 %v1282, %v1290
        %1293 = vrot.lane.b32.xlu0 %v320, 52
        %v1294 = vpop.permute.xlu0 %1293
        %1295 = vrot.lane.b32.xlu0 %v321, 52
        %v1296 = vpop.permute.xlu0 %1295
        %v1300 = vsel %vm412, %v1291, 0
        %v1303 = vsel %vm412, %v1292, 0
        %1305 = vmatprep.subr.mxu0 0.0
        %1306 = vmatpush1.msra.mxu0 0.0
        %1307 = vmatprep.subr.mxu0 0.0
        %1308 = vmatpush1.msra.mxu0 0.0
        %1309 = vmatprep.subr.mxu0 0.0
        %1310 = vmatpush1.msra.mxu0 0.0
        %1311 = vmatprep.subr.mxu0 0.0
        %1312 = vmatpush1.msra.mxu0 0.0
        %1313 = vmatprep.subr.mxu0 0.0
        %1314 = vmatpush1.msra.mxu0 0.0
        %1315 = vmatprep.subr.mxu0 0.0
        %1316 = vmatpush1.msra.mxu0 0.0
        %1317 = vmatprep.subr.mxu0 0.0
        %1318 = vmatpush1.msra.mxu0 0.0
        %1319 = vmatprep.subr.mxu0 0.0
        %1320 = vmatpush1.msra.mxu0 0.0
        %1321 = vmatprep.subr.mxu0 0.0
        %1322 = vmatpush1.msra.mxu0 0.0
        %1323 = vmatprep.subr.mxu0 0.0
        %1324 = vmatpush1.msra.mxu0 0.0
        %1325 = vmatprep.subr.mxu0 0.0
        %1326 = vmatpush1.msra.mxu0 0.0
        %1327 = vmatprep.subr.mxu0 0.0
        %1328 = vmatpush1.msra.mxu0 0.0
        %1329 = vmatprep.subr.mxu0 0.0
        %1330 = vmatpush1.msra.mxu0 0.0
        %1331 = vmatprep.subr.mxu0 0.0
        %1332 = vmatpush1.msra.mxu0 0.0
        %1333 = vmatprep.subr.mxu0 0.0
        %1334 = vmatpush1.msra.mxu0 %v1296
        %1335 = vmatprep.subr.mxu0 0.0
        %1336 = vmatpush1.msra.mxu0 %v1294
        %1337 = vmatprep.subr.mxu0 0.0
        %1338 = vmatpush2.msra.mxu0 0.0
        %1339 = vmatprep.subr.mxu0 0.0
        %1340 = vmatpush2.msra.mxu0 0.0
        %1341 = vmatprep.subr.mxu0 0.0
        %1342 = vmatpush2.msra.mxu0 0.0
        %1343 = vmatprep.subr.mxu0 0.0
        %1344 = vmatpush2.msra.mxu0 0.0
        %1345 = vmatprep.subr.mxu0 0.0
        %1346 = vmatpush2.msra.mxu0 0.0
        %1347 = vmatprep.subr.mxu0 0.0
        %1348 = vmatpush2.msra.mxu0 0.0
        %1349 = vmatprep.subr.mxu0 0.0
        %1350 = vmatpush2.msra.mxu0 0.0
        %1351 = vmatprep.subr.mxu0 0.0
        %1352 = vmatpush2.msra.mxu0 0.0
        %1353 = vmatprep.subr.mxu0 0.0
        %1354 = vmatpush2.msra.mxu0 0.0
        %1355 = vmatprep.subr.mxu0 0.0
        %1356 = vmatpush2.msra.mxu0 0.0
        %1357 = vmatprep.subr.mxu0 0.0
        %1358 = vmatpush2.msra.mxu0 0.0
        %1359 = vmatprep.subr.mxu0 0.0
        %1360 = vmatpush2.msra.mxu0 0.0
        %1361 = vmatprep.subr.mxu0 0.0
        %1362 = vmatpush2.msra.mxu0 0.0
        %1363 = vmatprep.subr.mxu0 0.0
        %1364 = vmatpush2.msra.mxu0 0.0
        %1365 = vmatprep.subr.mxu0 0.0
        %1366 = vmatpush2.msra.mxu0 0.0
        %1367 = vmatprep.subr.mxu0 0.0
        %1368 = vmatpush2.msra.mxu0 0.0
        %1369 = vmatprep.mubr.f32.mxu0 0.0
        %1370 = vmatmul.mubr.f32.gmra.mxu0 %v1300
        %v1371 = vpop.f32.mrf.mxu0
        %v1372 = vadd.f32 0.0, %v1371
        %v1373 = vpop.f32.mrf.mxu0
        %1374 = vmatprep.mubr.f32.mxu0 0.0
        %1375 = vmatmul.mubr.f32.gmra.mxu0 %v1303
        %v1376 = vpop.f32.mrf.mxu0
        %v1377 = vadd.f32 0.0, %v1376
        %v1378 = vpop.f32.mrf.mxu0
        %1379 = vdwg.mxu0
        %v1380 = vld [vmem:[%s3 + $0xc] sm:$0xf]
        %v1382 = vsel %vm328, %v1372, 0
        %v1385 = vsel %vm328, %v1377, 0
        %v1388 = vsel %vm730, %v1380, 0
        %1390 = vmatprep.subr.mxu0 0.0
        %1391 = vmatpush1.msra.mxu0 0.0
        %1392 = vmatprep.subr.mxu0 0.0
        %1393 = vmatpush1.msra.mxu0 0.0
        %1394 = vmatprep.subr.mxu0 0.0
        %1395 = vmatpush1.msra.mxu0 0.0
        %1396 = vmatprep.subr.mxu0 0.0
        %1397 = vmatpush1.msra.mxu0 0.0
        %1398 = vmatprep.subr.mxu0 0.0
        %1399 = vmatpush1.msra.mxu0 0.0
        %1400 = vmatprep.subr.mxu0 0.0
        %1401 = vmatpush1.msra.mxu0 0.0
        %1402 = vmatprep.subr.mxu0 0.0
        %1403 = vmatpush1.msra.mxu0 0.0
        %1404 = vmatprep.subr.mxu0 0.0
        %1405 = vmatpush1.msra.mxu0 0.0
        %1406 = vmatprep.subr.mxu0 0.0
        %1407 = vmatpush1.msra.mxu0 0.0
        %1408 = vmatprep.subr.mxu0 0.0
        %1409 = vmatpush1.msra.mxu0 0.0
        %1410 = vmatprep.subr.mxu0 0.0
        %1411 = vmatpush1.msra.mxu0 0.0
        %1412 = vmatprep.subr.mxu0 0.0
        %1413 = vmatpush1.msra.mxu0 0.0
        %1414 = vmatprep.subr.mxu0 0.0
        %1415 = vmatpush1.msra.mxu0 0.0
        %1416 = vmatprep.subr.mxu0 0.0
        %1417 = vmatpush1.msra.mxu0 0.0
        %1418 = vmatprep.subr.mxu0 0.0
        %1419 = vmatpush1.msra.mxu0 0.0
        %1420 = vmatprep.subr.mxu0 0.0
        %1421 = vmatpush1.msra.mxu0 %v1388
        %1422 = vmatprep.subr.mxu0 0.0
        %1423 = vmatpush2.msra.mxu0 0.0
        %1424 = vmatprep.subr.mxu0 0.0
        %1425 = vmatpush2.msra.mxu0 0.0
        %1426 = vmatprep.subr.mxu0 0.0
        %1427 = vmatpush2.msra.mxu0 0.0
        %1428 = vmatprep.subr.mxu0 0.0
        %1429 = vmatpush2.msra.mxu0 0.0
        %1430 = vmatprep.subr.mxu0 0.0
        %1431 = vmatpush2.msra.mxu0 0.0
        %1432 = vmatprep.subr.mxu0 0.0
        %1433 = vmatpush2.msra.mxu0 0.0
        %1434 = vmatprep.subr.mxu0 0.0
        %1435 = vmatpush2.msra.mxu0 0.0
        %1436 = vmatprep.subr.mxu0 0.0
        %1437 = vmatpush2.msra.mxu0 0.0
        %1438 = vmatprep.subr.mxu0 0.0
        %1439 = vmatpush2.msra.mxu0 0.0
        %1440 = vmatprep.subr.mxu0 0.0
        %1441 = vmatpush2.msra.mxu0 0.0
        %1442 = vmatprep.subr.mxu0 0.0
        %1443 = vmatpush2.msra.mxu0 0.0
        %1444 = vmatprep.subr.mxu0 0.0
        %1445 = vmatpush2.msra.mxu0 0.0
        %1446 = vmatprep.subr.mxu0 0.0
        %1447 = vmatpush2.msra.mxu0 0.0
        %1448 = vmatprep.subr.mxu0 0.0
        %1449 = vmatpush2.msra.mxu0 0.0
        %1450 = vmatprep.subr.mxu0 0.0
        %1451 = vmatpush2.msra.mxu0 0.0
        %1452 = vmatprep.subr.mxu0 0.0
        %1453 = vmatpush2.msra.mxu0 0.0
        %1454 = vmatprep.mubr.f32.mxu0 0.0
        %1455 = vmatmul.mubr.f32.gmra.mxu0 %v1382
        %v1456 = vpop.f32.mrf.mxu0
        %v1457 = vadd.f32 0.0, %v1456
        %v1458 = vpop.f32.mrf.mxu0
        %1459 = vmatprep.mubr.f32.mxu0 0.0
        %1460 = vmatmul.mubr.f32.gmra.mxu0 %v1385
        %v1461 = vpop.f32.mrf.mxu0
        %v1462 = vadd.f32 0.0, %v1461
        %v1463 = vpop.f32.mrf.mxu0
        %1464 = vdwg.mxu0
        %v1465 = vadd.f32 %v1178, %v1457
        %v1466 = vadd.f32 %v1179, %v1462
        %1467 = vrot.lane.b32.xlu0 %v320, 112
        %v1468 = vpop.permute.xlu0 %1467
        %1469 = vrot.lane.b32.xlu0 %v321, 112
        %v1470 = vpop.permute.xlu0 %1469
        %1471 = vrot.lane.b32.xlu0 %v320, 80
        %v1472 = vpop.permute.xlu0 %1471
        %1473 = vrot.lane.b32.xlu0 %v321, 80
        %v1474 = vpop.permute.xlu0 %1473
        %v1475 = vsel %vm328, %v1468, 0
        %v1477 = vsel %vm328, %v1470, 0
        %v1479 = vsel %vm328, %v1472, 0
        %v1481 = vsel %vm328, %v1474, 0
        %1483 = vmatprep.subr.mxu0 0.0
        %1484 = vmatpush1.xpose.msra.mxu0 0.0
        %1485 = vmatprep.subr.mxu0 0.0
        %1486 = vmatpush1.xpose.msra.mxu0 0.0
        %1487 = vmatprep.subr.mxu0 0.0
        %1488 = vmatpush1.xpose.msra.mxu0 0.0
        %1489 = vmatprep.subr.mxu0 0.0
        %1490 = vmatpush1.xpose.msra.mxu0 0.0
        %1491 = vmatprep.subr.mxu0 0.0
        %1492 = vmatpush1.xpose.msra.mxu0 0.0
        %1493 = vmatprep.subr.mxu0 0.0
        %1494 = vmatpush1.xpose.msra.mxu0 0.0
        %1495 = vmatprep.subr.mxu0 0.0
        %1496 = vmatpush1.xpose.msra.mxu0 0.0
        %1497 = vmatprep.subr.mxu0 0.0
        %1498 = vmatpush1.xpose.msra.mxu0 0.0
        %1499 = vmatprep.subr.mxu0 0.0
        %1500 = vmatpush1.xpose.msra.mxu0 0.0
        %1501 = vmatprep.subr.mxu0 0.0
        %1502 = vmatpush1.xpose.msra.mxu0 0.0
        %1503 = vmatprep.subr.mxu0 0.0
        %1504 = vmatpush1.xpose.msra.mxu0 0.0
        %1505 = vmatprep.subr.mxu0 0.0
        %1506 = vmatpush1.xpose.msra.mxu0 0.0
        %1507 = vmatprep.subr.mxu0 0.0
        %1508 = vmatpush1.xpose.msra.mxu0 0.0
        %1509 = vmatprep.subr.mxu0 0.0
        %1510 = vmatpush1.xpose.msra.mxu0 0.0
        %1511 = vmatprep.subr.mxu0 0.0
        %1512 = vmatpush1.xpose.msra.mxu0 %v1481
        %1513 = vmatprep.subr.mxu0 0.0
        %1514 = vmatpush1.xpose.msra.mxu0 %v1479
        %1515 = vmatprep.subr.mxu0 0.0
        %1516 = vmatpush2.xpose.msra.mxu0 0.0
        %1517 = vmatprep.subr.mxu0 0.0
        %1518 = vmatpush2.xpose.msra.mxu0 0.0
        %1519 = vmatprep.subr.mxu0 0.0
        %1520 = vmatpush2.xpose.msra.mxu0 0.0
        %1521 = vmatprep.subr.mxu0 0.0
        %1522 = vmatpush2.xpose.msra.mxu0 0.0
        %1523 = vmatprep.subr.mxu0 0.0
        %1524 = vmatpush2.xpose.msra.mxu0 0.0
        %1525 = vmatprep.subr.mxu0 0.0
        %1526 = vmatpush2.xpose.msra.mxu0 0.0
        %1527 = vmatprep.subr.mxu0 0.0
        %1528 = vmatpush2.xpose.msra.mxu0 0.0
        %1529 = vmatprep.subr.mxu0 0.0
        %1530 = vmatpush2.xpose.msra.mxu0 0.0
        %1531 = vmatprep.subr.mxu0 0.0
        %1532 = vmatpush2.xpose.msra.mxu0 0.0
        %1533 = vmatprep.subr.mxu0 0.0
        %1534 = vmatpush2.xpose.msra.mxu0 0.0
        %1535 = vmatprep.subr.mxu0 0.0
        %1536 = vmatpush2.xpose.msra.mxu0 0.0
        %1537 = vmatprep.subr.mxu0 0.0
        %1538 = vmatpush2.xpose.msra.mxu0 0.0
        %1539 = vmatprep.subr.mxu0 0.0
        %1540 = vmatpush2.xpose.msra.mxu0 0.0
        %1541 = vmatprep.subr.mxu0 0.0
        %1542 = vmatpush2.xpose.msra.mxu0 0.0
        %1543 = vmatprep.subr.mxu0 0.0
        %1544 = vmatpush2.xpose.msra.mxu0 0.0
        %1545 = vmatprep.subr.mxu0 0.0
        %1546 = vmatpush2.xpose.msra.mxu0 0.0
        %1547 = vmatprep.mubr.f32.mxu0 0.0
        %1548 = vmatmul.mubr.f32.gmra.mxu0 %v1475
        %v1549 = vpop.f32.mrf.mxu0
        %v1550 = vadd.f32 0.0, %v1549
        %v1551 = vpop.f32.mrf.mxu0
        %1552 = vmatprep.mubr.f32.mxu0 0.0
        %1553 = vmatmul.mubr.f32.gmra.mxu0 %v1477
        %v1554 = vpop.f32.mrf.mxu0
        %v1555 = vadd.f32 0.0, %v1554
        %v1556 = vpop.f32.mrf.mxu0
        %1557 = vdwg.mxu0
        %v1558 = vsel %vm412, %v1550, -inf
        %1559 = vmax.xlane.f32.xlu0 %v1558
        %v1560 = vpop.xlane.xlu0 %1559
        %v1561 = vsel %vm412, %v1555, -inf
        %1562 = vmax.xlane.f32.xlu0 %v1561
        %v1563 = vpop.xlane.xlu0 %1562
        %v1564 = vsub.f32 %v1550, %v1560
        %v1565 = vsub.f32 %v1555, %v1563
        %v1566 = vmul.f32 %v1564, 1.442695
        %v1567 = vpow.pop %v1566
        %v1568 = vmul.f32 %v1565, 1.442695
        %v1569 = vpow.pop %v1568
        %v1570 = vsel %vm412, %v1567, 0.0
        %1571 = vadd.xlane.f32.xlu0 %v1570
        %v1572 = vpop.xlane.xlu0 %1571
        %v1573 = vsel %vm412, %v1569, 0.0
        %1574 = vadd.xlane.f32.xlu0 %v1573
        %v1575 = vpop.xlane.xlu0 %1574
        %v1576 = vrcp.pop %v1572
        %v1577 = vrcp.pop %v1575
        %v1578 = vmul.f32 %v1567, %v1576
        %v1579 = vmul.f32 %v1569, %v1577
        %1580 = vrot.lane.b32.xlu0 %v320, 48
        %v1581 = vpop.permute.xlu0 %1580
        %1582 = vrot.lane.b32.xlu0 %v321, 48
        %v1583 = vpop.permute.xlu0 %1582
        %v1587 = vsel %vm412, %v1578, 0
        %v1590 = vsel %vm412, %v1579, 0
        %1592 = vmatprep.subr.mxu0 0.0
        %1593 = vmatpush1.msra.mxu0 0.0
        %1594 = vmatprep.subr.mxu0 0.0
        %1595 = vmatpush1.msra.mxu0 0.0
        %1596 = vmatprep.subr.mxu0 0.0
        %1597 = vmatpush1.msra.mxu0 0.0
        %1598 = vmatprep.subr.mxu0 0.0
        %1599 = vmatpush1.msra.mxu0 0.0
        %1600 = vmatprep.subr.mxu0 0.0
        %1601 = vmatpush1.msra.mxu0 0.0
        %1602 = vmatprep.subr.mxu0 0.0
        %1603 = vmatpush1.msra.mxu0 0.0
        %1604 = vmatprep.subr.mxu0 0.0
        %1605 = vmatpush1.msra.mxu0 0.0
        %1606 = vmatprep.subr.mxu0 0.0
        %1607 = vmatpush1.msra.mxu0 0.0
        %1608 = vmatprep.subr.mxu0 0.0
        %1609 = vmatpush1.msra.mxu0 0.0
        %1610 = vmatprep.subr.mxu0 0.0
        %1611 = vmatpush1.msra.mxu0 0.0
        %1612 = vmatprep.subr.mxu0 0.0
        %1613 = vmatpush1.msra.mxu0 0.0
        %1614 = vmatprep.subr.mxu0 0.0
        %1615 = vmatpush1.msra.mxu0 0.0
        %1616 = vmatprep.subr.mxu0 0.0
        %1617 = vmatpush1.msra.mxu0 0.0
        %1618 = vmatprep.subr.mxu0 0.0
        %1619 = vmatpush1.msra.mxu0 0.0
        %1620 = vmatprep.subr.mxu0 0.0
        %1621 = vmatpush1.msra.mxu0 %v1583
        %1622 = vmatprep.subr.mxu0 0.0
        %1623 = vmatpush1.msra.mxu0 %v1581
        %1624 = vmatprep.subr.mxu0 0.0
        %1625 = vmatpush2.msra.mxu0 0.0
        %1626 = vmatprep.subr.mxu0 0.0
        %1627 = vmatpush2.msra.mxu0 0.0
        %1628 = vmatprep.subr.mxu0 0.0
        %1629 = vmatpush2.msra.mxu0 0.0
        %1630 = vmatprep.subr.mxu0 0.0
        %1631 = vmatpush2.msra.mxu0 0.0
        %1632 = vmatprep.subr.mxu0 0.0
        %1633 = vmatpush2.msra.mxu0 0.0
        %1634 = vmatprep.subr.mxu0 0.0
        %1635 = vmatpush2.msra.mxu0 0.0
        %1636 = vmatprep.subr.mxu0 0.0
        %1637 = vmatpush2.msra.mxu0 0.0
        %1638 = vmatprep.subr.mxu0 0.0
        %1639 = vmatpush2.msra.mxu0 0.0
        %1640 = vmatprep.subr.mxu0 0.0
        %1641 = vmatpush2.msra.mxu0 0.0
        %1642 = vmatprep.subr.mxu0 0.0
        %1643 = vmatpush2.msra.mxu0 0.0
        %1644 = vmatprep.subr.mxu0 0.0
        %1645 = vmatpush2.msra.mxu0 0.0
        %1646 = vmatprep.subr.mxu0 0.0
        %1647 = vmatpush2.msra.mxu0 0.0
        %1648 = vmatprep.subr.mxu0 0.0
        %1649 = vmatpush2.msra.mxu0 0.0
        %1650 = vmatprep.subr.mxu0 0.0
        %1651 = vmatpush2.msra.mxu0 0.0
        %1652 = vmatprep.subr.mxu0 0.0
        %1653 = vmatpush2.msra.mxu0 0.0
        %1654 = vmatprep.subr.mxu0 0.0
        %1655 = vmatpush2.msra.mxu0 0.0
        %1656 = vmatprep.mubr.f32.mxu0 0.0
        %1657 = vmatmul.mubr.f32.gmra.mxu0 %v1587
        %v1658 = vpop.f32.mrf.mxu0
        %v1659 = vadd.f32 0.0, %v1658
        %v1660 = vpop.f32.mrf.mxu0
        %1661 = vmatprep.mubr.f32.mxu0 0.0
        %1662 = vmatmul.mubr.f32.gmra.mxu0 %v1590
        %v1663 = vpop.f32.mrf.mxu0
        %v1664 = vadd.f32 0.0, %v1663
        %v1665 = vpop.f32.mrf.mxu0
        %1666 = vdwg.mxu0
        %v1667 = vld [vmem:[%s3 + $0x10] sm:$0xf]
        %v1669 = vsel %vm328, %v1659, 0
        %v1672 = vsel %vm328, %v1664, 0
        %v1675 = vsel %vm730, %v1667, 0
        %1677 = vmatprep.subr.mxu0 0.0
        %1678 = vmatpush1.msra.mxu0 0.0
        %1679 = vmatprep.subr.mxu0 0.0
        %1680 = vmatpush1.msra.mxu0 0.0
        %1681 = vmatprep.subr.mxu0 0.0
        %1682 = vmatpush1.msra.mxu0 0.0
        %1683 = vmatprep.subr.mxu0 0.0
        %1684 = vmatpush1.msra.mxu0 0.0
        %1685 = vmatprep.subr.mxu0 0.0
        %1686 = vmatpush1.msra.mxu0 0.0
        %1687 = vmatprep.subr.mxu0 0.0
        %1688 = vmatpush1.msra.mxu0 0.0
        %1689 = vmatprep.subr.mxu0 0.0
        %1690 = vmatpush1.msra.mxu0 0.0
        %1691 = vmatprep.subr.mxu0 0.0
        %1692 = vmatpush1.msra.mxu0 0.0
        %1693 = vmatprep.subr.mxu0 0.0
        %1694 = vmatpush1.msra.mxu0 0.0
        %1695 = vmatprep.subr.mxu0 0.0
        %1696 = vmatpush1.msra.mxu0 0.0
        %1697 = vmatprep.subr.mxu0 0.0
        %1698 = vmatpush1.msra.mxu0 0.0
        %1699 = vmatprep.subr.mxu0 0.0
        %1700 = vmatpush1.msra.mxu0 0.0
        %1701 = vmatprep.subr.mxu0 0.0
        %1702 = vmatpush1.msra.mxu0 0.0
        %1703 = vmatprep.subr.mxu0 0.0
        %1704 = vmatpush1.msra.mxu0 0.0
        %1705 = vmatprep.subr.mxu0 0.0
        %1706 = vmatpush1.msra.mxu0 0.0
        %1707 = vmatprep.subr.mxu0 0.0
        %1708 = vmatpush1.msra.mxu0 %v1675
        %1709 = vmatprep.subr.mxu0 0.0
        %1710 = vmatpush2.msra.mxu0 0.0
        %1711 = vmatprep.subr.mxu0 0.0
        %1712 = vmatpush2.msra.mxu0 0.0
        %1713 = vmatprep.subr.mxu0 0.0
        %1714 = vmatpush2.msra.mxu0 0.0
        %1715 = vmatprep.subr.mxu0 0.0
        %1716 = vmatpush2.msra.mxu0 0.0
        %1717 = vmatprep.subr.mxu0 0.0
        %1718 = vmatpush2.msra.mxu0 0.0
        %1719 = vmatprep.subr.mxu0 0.0
        %1720 = vmatpush2.msra.mxu0 0.0
        %1721 = vmatprep.subr.mxu0 0.0
        %1722 = vmatpush2.msra.mxu0 0.0
        %1723 = vmatprep.subr.mxu0 0.0
        %1724 = vmatpush2.msra.mxu0 0.0
        %1725 = vmatprep.subr.mxu0 0.0
        %1726 = vmatpush2.msra.mxu0 0.0
        %1727 = vmatprep.subr.mxu0 0.0
        %1728 = vmatpush2.msra.mxu0 0.0
        %1729 = vmatprep.subr.mxu0 0.0
        %1730 = vmatpush2.msra.mxu0 0.0
        %1731 = vmatprep.subr.mxu0 0.0
        %1732 = vmatpush2.msra.mxu0 0.0
        %1733 = vmatprep.subr.mxu0 0.0
        %1734 = vmatpush2.msra.mxu0 0.0
        %1735 = vmatprep.subr.mxu0 0.0
        %1736 = vmatpush2.msra.mxu0 0.0
        %1737 = vmatprep.subr.mxu0 0.0
        %1738 = vmatpush2.msra.mxu0 0.0
        %1739 = vmatprep.subr.mxu0 0.0
        %1740 = vmatpush2.msra.mxu0 0.0
        %1741 = vmatprep.mubr.f32.mxu0 0.0
        %1742 = vmatmul.mubr.f32.gmra.mxu0 %v1669
        %v1743 = vpop.f32.mrf.mxu0
        %v1744 = vadd.f32 0.0, %v1743
        %v1745 = vpop.f32.mrf.mxu0
        %1746 = vmatprep.mubr.f32.mxu0 0.0
        %1747 = vmatmul.mubr.f32.gmra.mxu0 %v1672
        %v1748 = vpop.f32.mrf.mxu0
        %v1749 = vadd.f32 0.0, %v1748
        %v1750 = vpop.f32.mrf.mxu0
        %1751 = vdwg.mxu0
        %v1752 = vadd.f32 %v1465, %v1744
        %v1753 = vadd.f32 %v1466, %v1749
        %1754 = vrot.lane.b32.xlu0 %v320, 108
        %v1755 = vpop.permute.xlu0 %1754
        %1756 = vrot.lane.b32.xlu0 %v321, 108
        %v1757 = vpop.permute.xlu0 %1756
        %1758 = vrot.lane.b32.xlu0 %v320, 76
        %v1759 = vpop.permute.xlu0 %1758
        %1760 = vrot.lane.b32.xlu0 %v321, 76
        %v1761 = vpop.permute.xlu0 %1760
        %v1762 = vsel %vm328, %v1755, 0
        %v1764 = vsel %vm328, %v1757, 0
        %v1766 = vsel %vm328, %v1759, 0
        %v1768 = vsel %vm328, %v1761, 0
        %1770 = vmatprep.subr.mxu0 0.0
        %1771 = vmatpush1.xpose.msra.mxu0 0.0
        %1772 = vmatprep.subr.mxu0 0.0
        %1773 = vmatpush1.xpose.msra.mxu0 0.0
        %1774 = vmatprep.subr.mxu0 0.0
        %1775 = vmatpush1.xpose.msra.mxu0 0.0
        %1776 = vmatprep.subr.mxu0 0.0
        %1777 = vmatpush1.xpose.msra.mxu0 0.0
        %1778 = vmatprep.subr.mxu0 0.0
        %1779 = vmatpush1.xpose.msra.mxu0 0.0
        %1780 = vmatprep.subr.mxu0 0.0
        %1781 = vmatpush1.xpose.msra.mxu0 0.0
        %1782 = vmatprep.subr.mxu0 0.0
        %1783 = vmatpush1.xpose.msra.mxu0 0.0
        %1784 = vmatprep.subr.mxu0 0.0
        %1785 = vmatpush1.xpose.msra.mxu0 0.0
        %1786 = vmatprep.subr.mxu0 0.0
        %1787 = vmatpush1.xpose.msra.mxu0 0.0
        %1788 = vmatprep.subr.mxu0 0.0
        %1789 = vmatpush1.xpose.msra.mxu0 0.0
        %1790 = vmatprep.subr.mxu0 0.0
        %1791 = vmatpush1.xpose.msra.mxu0 0.0
        %1792 = vmatprep.subr.mxu0 0.0
        %1793 = vmatpush1.xpose.msra.mxu0 0.0
        %1794 = vmatprep.subr.mxu0 0.0
        %1795 = vmatpush1.xpose.msra.mxu0 0.0
        %1796 = vmatprep.subr.mxu0 0.0
        %1797 = vmatpush1.xpose.msra.mxu0 0.0
        %1798 = vmatprep.subr.mxu0 0.0
        %1799 = vmatpush1.xpose.msra.mxu0 %v1768
        %1800 = vmatprep.subr.mxu0 0.0
        %1801 = vmatpush1.xpose.msra.mxu0 %v1766
        %1802 = vmatprep.subr.mxu0 0.0
        %1803 = vmatpush2.xpose.msra.mxu0 0.0
        %1804 = vmatprep.subr.mxu0 0.0
        %1805 = vmatpush2.xpose.msra.mxu0 0.0
        %1806 = vmatprep.subr.mxu0 0.0
        %1807 = vmatpush2.xpose.msra.mxu0 0.0
        %1808 = vmatprep.subr.mxu0 0.0
        %1809 = vmatpush2.xpose.msra.mxu0 0.0
        %1810 = vmatprep.subr.mxu0 0.0
        %1811 = vmatpush2.xpose.msra.mxu0 0.0
        %1812 = vmatprep.subr.mxu0 0.0
        %1813 = vmatpush2.xpose.msra.mxu0 0.0
        %1814 = vmatprep.subr.mxu0 0.0
        %1815 = vmatpush2.xpose.msra.mxu0 0.0
        %1816 = vmatprep.subr.mxu0 0.0
        %1817 = vmatpush2.xpose.msra.mxu0 0.0
        %1818 = vmatprep.subr.mxu0 0.0
        %1819 = vmatpush2.xpose.msra.mxu0 0.0
        %1820 = vmatprep.subr.mxu0 0.0
        %1821 = vmatpush2.xpose.msra.mxu0 0.0
        %1822 = vmatprep.subr.mxu0 0.0
        %1823 = vmatpush2.xpose.msra.mxu0 0.0
        %1824 = vmatprep.subr.mxu0 0.0
        %1825 = vmatpush2.xpose.msra.mxu0 0.0
        %1826 = vmatprep.subr.mxu0 0.0
        %1827 = vmatpush2.xpose.msra.mxu0 0.0
        %1828 = vmatprep.subr.mxu0 0.0
        %1829 = vmatpush2.xpose.msra.mxu0 0.0
        %1830 = vmatprep.subr.mxu0 0.0
        %1831 = vmatpush2.xpose.msra.mxu0 0.0
        %1832 = vmatprep.subr.mxu0 0.0
        %1833 = vmatpush2.xpose.msra.mxu0 0.0
        %1834 = vmatprep.mubr.f32.mxu0 0.0
        %1835 = vmatmul.mubr.f32.gmra.mxu0 %v1762
        %v1836 = vpop.f32.mrf.mxu0
        %v1837 = vadd.f32 0.0, %v1836
        %v1838 = vpop.f32.mrf.mxu0
        %1839 = vmatprep.mubr.f32.mxu0 0.0
        %1840 = vmatmul.mubr.f32.gmra.mxu0 %v1764
        %v1841 = vpop.f32.mrf.mxu0
        %v1842 = vadd.f32 0.0, %v1841
        %v1843 = vpop.f32.mrf.mxu0
        %1844 = vdwg.mxu0
        %v1845 = vsel %vm412, %v1837, -inf
        %1846 = vmax.xlane.f32.xlu0 %v1845
        %v1847 = vpop.xlane.xlu0 %1846
        %v1848 = vsel %vm412, %v1842, -inf
        %1849 = vmax.xlane.f32.xlu0 %v1848
        %v1850 = vpop.xlane.xlu0 %1849
        %v1851 = vsub.f32 %v1837, %v1847
        %v1852 = vsub.f32 %v1842, %v1850
        %v1853 = vmul.f32 %v1851, 1.442695
        %v1854 = vpow.pop %v1853
        %v1855 = vmul.f32 %v1852, 1.442695
        %v1856 = vpow.pop %v1855
        %v1857 = vsel %vm412, %v1854, 0.0
        %1858 = vadd.xlane.f32.xlu0 %v1857
        %v1859 = vpop.xlane.xlu0 %1858
        %v1860 = vsel %vm412, %v1856, 0.0
        %1861 = vadd.xlane.f32.xlu0 %v1860
        %v1862 = vpop.xlane.xlu0 %1861
        %v1863 = vrcp.pop %v1859
        %v1864 = vrcp.pop %v1862
        %v1865 = vmul.f32 %v1854, %v1863
        %v1866 = vmul.f32 %v1856, %v1864
        %1867 = vrot.lane.b32.xlu0 %v320, 44
        %v1868 = vpop.permute.xlu0 %1867
        %1869 = vrot.lane.b32.xlu0 %v321, 44
        %v1870 = vpop.permute.xlu0 %1869
        %v1874 = vsel %vm412, %v1865, 0
        %v1877 = vsel %vm412, %v1866, 0
        %1879 = vmatprep.subr.mxu0 0.0
        %1880 = vmatpush1.msra.mxu0 0.0
        %1881 = vmatprep.subr.mxu0 0.0
        %1882 = vmatpush1.msra.mxu0 0.0
        %1883 = vmatprep.subr.mxu0 0.0
        %1884 = vmatpush1.msra.mxu0 0.0
        %1885 = vmatprep.subr.mxu0 0.0
        %1886 = vmatpush1.msra.mxu0 0.0
        %1887 = vmatprep.subr.mxu0 0.0
        %1888 = vmatpush1.msra.mxu0 0.0
        %1889 = vmatprep.subr.mxu0 0.0
        %1890 = vmatpush1.msra.mxu0 0.0
        %1891 = vmatprep.subr.mxu0 0.0
        %1892 = vmatpush1.msra.mxu0 0.0
        %1893 = vmatprep.subr.mxu0 0.0
        %1894 = vmatpush1.msra.mxu0 0.0
        %1895 = vmatprep.subr.mxu0 0.0
        %1896 = vmatpush1.msra.mxu0 0.0
        %1897 = vmatprep.subr.mxu0 0.0
        %1898 = vmatpush1.msra.mxu0 0.0
        %1899 = vmatprep.subr.mxu0 0.0
        %1900 = vmatpush1.msra.mxu0 0.0
        %1901 = vmatprep.subr.mxu0 0.0
        %1902 = vmatpush1.msra.mxu0 0.0
        %1903 = vmatprep.subr.mxu0 0.0
        %1904 = vmatpush1.msra.mxu0 0.0
        %1905 = vmatprep.subr.mxu0 0.0
        %1906 = vmatpush1.msra.mxu0 0.0
        %1907 = vmatprep.subr.mxu0 0.0
        %1908 = vmatpush1.msra.mxu0 %v1870
        %1909 = vmatprep.subr.mxu0 0.0
        %1910 = vmatpush1.msra.mxu0 %v1868
        %1911 = vmatprep.subr.mxu0 0.0
        %1912 = vmatpush2.msra.mxu0 0.0
        %1913 = vmatprep.subr.mxu0 0.0
        %1914 = vmatpush2.msra.mxu0 0.0
        %1915 = vmatprep.subr.mxu0 0.0
        %1916 = vmatpush2.msra.mxu0 0.0
        %1917 = vmatprep.subr.mxu0 0.0
        %1918 = vmatpush2.msra.mxu0 0.0
        %1919 = vmatprep.subr.mxu0 0.0
        %1920 = vmatpush2.msra.mxu0 0.0
        %1921 = vmatprep.subr.mxu0 0.0
        %1922 = vmatpush2.msra.mxu0 0.0
        %1923 = vmatprep.subr.mxu0 0.0
        %1924 = vmatpush2.msra.mxu0 0.0
        %1925 = vmatprep.subr.mxu0 0.0
        %1926 = vmatpush2.msra.mxu0 0.0
        %1927 = vmatprep.subr.mxu0 0.0
        %1928 = vmatpush2.msra.mxu0 0.0
        %1929 = vmatprep.subr.mxu0 0.0
        %1930 = vmatpush2.msra.mxu0 0.0
        %1931 = vmatprep.subr.mxu0 0.0
        %1932 = vmatpush2.msra.mxu0 0.0
        %1933 = vmatprep.subr.mxu0 0.0
        %1934 = vmatpush2.msra.mxu0 0.0
        %1935 = vmatprep.subr.mxu0 0.0
        %1936 = vmatpush2.msra.mxu0 0.0
        %1937 = vmatprep.subr.mxu0 0.0
        %1938 = vmatpush2.msra.mxu0 0.0
        %1939 = vmatprep.subr.mxu0 0.0
        %1940 = vmatpush2.msra.mxu0 0.0
        %1941 = vmatprep.subr.mxu0 0.0
        %1942 = vmatpush2.msra.mxu0 0.0
        %1943 = vmatprep.mubr.f32.mxu0 0.0
        %1944 = vmatmul.mubr.f32.gmra.mxu0 %v1874
        %v1945 = vpop.f32.mrf.mxu0
        %v1946 = vadd.f32 0.0, %v1945
        %v1947 = vpop.f32.mrf.mxu0
        %1948 = vmatprep.mubr.f32.mxu0 0.0
        %1949 = vmatmul.mubr.f32.gmra.mxu0 %v1877
        %v1950 = vpop.f32.mrf.mxu0
        %v1951 = vadd.f32 0.0, %v1950
        %v1952 = vpop.f32.mrf.mxu0
        %1953 = vdwg.mxu0
        %v1954 = vld [vmem:[%s3 + $0x14] sm:$0xf]
        %v1956 = vsel %vm328, %v1946, 0
        %v1959 = vsel %vm328, %v1951, 0
        %v1962 = vsel %vm730, %v1954, 0
        %1964 = vmatprep.subr.mxu0 0.0
        %1965 = vmatpush1.msra.mxu0 0.0
        %1966 = vmatprep.subr.mxu0 0.0
        %1967 = vmatpush1.msra.mxu0 0.0
        %1968 = vmatprep.subr.mxu0 0.0
        %1969 = vmatpush1.msra.mxu0 0.0
        %1970 = vmatprep.subr.mxu0 0.0
        %1971 = vmatpush1.msra.mxu0 0.0
        %1972 = vmatprep.subr.mxu0 0.0
        %1973 = vmatpush1.msra.mxu0 0.0
        %1974 = vmatprep.subr.mxu0 0.0
        %1975 = vmatpush1.msra.mxu0 0.0
        %1976 = vmatprep.subr.mxu0 0.0
        %1977 = vmatpush1.msra.mxu0 0.0
        %1978 = vmatprep.subr.mxu0 0.0
        %1979 = vmatpush1.msra.mxu0 0.0
        %1980 = vmatprep.subr.mxu0 0.0
        %1981 = vmatpush1.msra.mxu0 0.0
        %1982 = vmatprep.subr.mxu0 0.0
        %1983 = vmatpush1.msra.mxu0 0.0
        %1984 = vmatprep.subr.mxu0 0.0
        %1985 = vmatpush1.msra.mxu0 0.0
        %1986 = vmatprep.subr.mxu0 0.0
        %1987 = vmatpush1.msra.mxu0 0.0
        %1988 = vmatprep.subr.mxu0 0.0
        %1989 = vmatpush1.msra.mxu0 0.0
        %1990 = vmatprep.subr.mxu0 0.0
        %1991 = vmatpush1.msra.mxu0 0.0
        %1992 = vmatprep.subr.mxu0 0.0
        %1993 = vmatpush1.msra.mxu0 0.0
        %1994 = vmatprep.subr.mxu0 0.0
        %1995 = vmatpush1.msra.mxu0 %v1962
        %1996 = vmatprep.subr.mxu0 0.0
        %1997 = vmatpush2.msra.mxu0 0.0
        %1998 = vmatprep.subr.mxu0 0.0
        %1999 = vmatpush2.msra.mxu0 0.0
        %2000 = vmatprep.subr.mxu0 0.0
        %2001 = vmatpush2.msra.mxu0 0.0
        %2002 = vmatprep.subr.mxu0 0.0
        %2003 = vmatpush2.msra.mxu0 0.0
        %2004 = vmatprep.subr.mxu0 0.0
        %2005 = vmatpush2.msra.mxu0 0.0
        %2006 = vmatprep.subr.mxu0 0.0
        %2007 = vmatpush2.msra.mxu0 0.0
        %2008 = vmatprep.subr.mxu0 0.0
        %2009 = vmatpush2.msra.mxu0 0.0
        %2010 = vmatprep.subr.mxu0 0.0
        %2011 = vmatpush2.msra.mxu0 0.0
        %2012 = vmatprep.subr.mxu0 0.0
        %2013 = vmatpush2.msra.mxu0 0.0
        %2014 = vmatprep.subr.mxu0 0.0
        %2015 = vmatpush2.msra.mxu0 0.0
        %2016 = vmatprep.subr.mxu0 0.0
        %2017 = vmatpush2.msra.mxu0 0.0
        %2018 = vmatprep.subr.mxu0 0.0
        %2019 = vmatpush2.msra.mxu0 0.0
        %2020 = vmatprep.subr.mxu0 0.0
        %2021 = vmatpush2.msra.mxu0 0.0
        %2022 = vmatprep.subr.mxu0 0.0
        %2023 = vmatpush2.msra.mxu0 0.0
        %2024 = vmatprep.subr.mxu0 0.0
        %2025 = vmatpush2.msra.mxu0 0.0
        %2026 = vmatprep.subr.mxu0 0.0
        %2027 = vmatpush2.msra.mxu0 0.0
        %2028 = vmatprep.mubr.f32.mxu0 0.0
        %2029 = vmatmul.mubr.f32.gmra.mxu0 %v1956
        %v2030 = vpop.f32.mrf.mxu0
        %v2031 = vadd.f32 0.0, %v2030
        %v2032 = vpop.f32.mrf.mxu0
        %2033 = vmatprep.mubr.f32.mxu0 0.0
        %2034 = vmatmul.mubr.f32.gmra.mxu0 %v1959
        %v2035 = vpop.f32.mrf.mxu0
        %v2036 = vadd.f32 0.0, %v2035
        %v2037 = vpop.f32.mrf.mxu0
        %2038 = vdwg.mxu0
        %v2039 = vadd.f32 %v1752, %v2031
        %v2040 = vadd.f32 %v1753, %v2036
        %2041 = vrot.lane.b32.xlu0 %v320, 104
        %v2042 = vpop.permute.xlu0 %2041
        %2043 = vrot.lane.b32.xlu0 %v321, 104
        %v2044 = vpop.permute.xlu0 %2043
        %2045 = vrot.lane.b32.xlu0 %v320, 72
        %v2046 = vpop.permute.xlu0 %2045
        %2047 = vrot.lane.b32.xlu0 %v321, 72
        %v2048 = vpop.permute.xlu0 %2047
        %v2049 = vsel %vm328, %v2042, 0
        %v2051 = vsel %vm328, %v2044, 0
        %v2053 = vsel %vm328, %v2046, 0
        %v2055 = vsel %vm328, %v2048, 0
        %2057 = vmatprep.subr.mxu0 0.0
        %2058 = vmatpush1.xpose.msra.mxu0 0.0
        %2059 = vmatprep.subr.mxu0 0.0
        %2060 = vmatpush1.xpose.msra.mxu0 0.0
        %2061 = vmatprep.subr.mxu0 0.0
        %2062 = vmatpush1.xpose.msra.mxu0 0.0
        %2063 = vmatprep.subr.mxu0 0.0
        %2064 = vmatpush1.xpose.msra.mxu0 0.0
        %2065 = vmatprep.subr.mxu0 0.0
        %2066 = vmatpush1.xpose.msra.mxu0 0.0
        %2067 = vmatprep.subr.mxu0 0.0
        %2068 = vmatpush1.xpose.msra.mxu0 0.0
        %2069 = vmatprep.subr.mxu0 0.0
        %2070 = vmatpush1.xpose.msra.mxu0 0.0
        %2071 = vmatprep.subr.mxu0 0.0
        %2072 = vmatpush1.xpose.msra.mxu0 0.0
        %2073 = vmatprep.subr.mxu0 0.0
        %2074 = vmatpush1.xpose.msra.mxu0 0.0
        %2075 = vmatprep.subr.mxu0 0.0
        %2076 = vmatpush1.xpose.msra.mxu0 0.0
        %2077 = vmatprep.subr.mxu0 0.0
        %2078 = vmatpush1.xpose.msra.mxu0 0.0
        %2079 = vmatprep.subr.mxu0 0.0
        %2080 = vmatpush1.xpose.msra.mxu0 0.0
        %2081 = vmatprep.subr.mxu0 0.0
        %2082 = vmatpush1.xpose.msra.mxu0 0.0
        %2083 = vmatprep.subr.mxu0 0.0
        %2084 = vmatpush1.xpose.msra.mxu0 0.0
        %2085 = vmatprep.subr.mxu0 0.0
        %2086 = vmatpush1.xpose.msra.mxu0 %v2055
        %2087 = vmatprep.subr.mxu0 0.0
        %2088 = vmatpush1.xpose.msra.mxu0 %v2053
        %2089 = vmatprep.subr.mxu0 0.0
        %2090 = vmatpush2.xpose.msra.mxu0 0.0
        %2091 = vmatprep.subr.mxu0 0.0
        %2092 = vmatpush2.xpose.msra.mxu0 0.0
        %2093 = vmatprep.subr.mxu0 0.0
        %2094 = vmatpush2.xpose.msra.mxu0 0.0
        %2095 = vmatprep.subr.mxu0 0.0
        %2096 = vmatpush2.xpose.msra.mxu0 0.0
        %2097 = vmatprep.subr.mxu0 0.0
        %2098 = vmatpush2.xpose.msra.mxu0 0.0
        %2099 = vmatprep.subr.mxu0 0.0
        %2100 = vmatpush2.xpose.msra.mxu0 0.0
        %2101 = vmatprep.subr.mxu0 0.0
        %2102 = vmatpush2.xpose.msra.mxu0 0.0
        %2103 = vmatprep.subr.mxu0 0.0
        %2104 = vmatpush2.xpose.msra.mxu0 0.0
        %2105 = vmatprep.subr.mxu0 0.0
        %2106 = vmatpush2.xpose.msra.mxu0 0.0
        %2107 = vmatprep.subr.mxu0 0.0
        %2108 = vmatpush2.xpose.msra.mxu0 0.0
        %2109 = vmatprep.subr.mxu0 0.0
        %2110 = vmatpush2.xpose.msra.mxu0 0.0
        %2111 = vmatprep.subr.mxu0 0.0
        %2112 = vmatpush2.xpose.msra.mxu0 0.0
        %2113 = vmatprep.subr.mxu0 0.0
        %2114 = vmatpush2.xpose.msra.mxu0 0.0
        %2115 = vmatprep.subr.mxu0 0.0
        %2116 = vmatpush2.xpose.msra.mxu0 0.0
        %2117 = vmatprep.subr.mxu0 0.0
        %2118 = vmatpush2.xpose.msra.mxu0 0.0
        %2119 = vmatprep.subr.mxu0 0.0
        %2120 = vmatpush2.xpose.msra.mxu0 0.0
        %2121 = vmatprep.mubr.f32.mxu0 0.0
        %2122 = vmatmul.mubr.f32.gmra.mxu0 %v2049
        %v2123 = vpop.f32.mrf.mxu0
        %v2124 = vadd.f32 0.0, %v2123
        %v2125 = vpop.f32.mrf.mxu0
        %2126 = vmatprep.mubr.f32.mxu0 0.0
        %2127 = vmatmul.mubr.f32.gmra.mxu0 %v2051
        %v2128 = vpop.f32.mrf.mxu0
        %v2129 = vadd.f32 0.0, %v2128
        %v2130 = vpop.f32.mrf.mxu0
        %2131 = vdwg.mxu0
        %v2132 = vsel %vm412, %v2124, -inf
        %2133 = vmax.xlane.f32.xlu0 %v2132
        %v2134 = vpop.xlane.xlu0 %2133
        %v2135 = vsel %vm412, %v2129, -inf
        %2136 = vmax.xlane.f32.xlu0 %v2135
        %v2137 = vpop.xlane.xlu0 %2136
        %v2138 = vsub.f32 %v2124, %v2134
        %v2139 = vsub.f32 %v2129, %v2137
        %v2140 = vmul.f32 %v2138, 1.442695
        %v2141 = vpow.pop %v2140
        %v2142 = vmul.f32 %v2139, 1.442695
        %v2143 = vpow.pop %v2142
        %v2144 = vsel %vm412, %v2141, 0.0
        %2145 = vadd.xlane.f32.xlu0 %v2144
        %v2146 = vpop.xlane.xlu0 %2145
        %v2147 = vsel %vm412, %v2143, 0.0
        %2148 = vadd.xlane.f32.xlu0 %v2147
        %v2149 = vpop.xlane.xlu0 %2148
        %v2150 = vrcp.pop %v2146
        %v2151 = vrcp.pop %v2149
        %v2152 = vmul.f32 %v2141, %v2150
        %v2153 = vmul.f32 %v2143, %v2151
        %2154 = vrot.lane.b32.xlu0 %v320, 40
        %v2155 = vpop.permute.xlu0 %2154
        %2156 = vrot.lane.b32.xlu0 %v321, 40
        %v2157 = vpop.permute.xlu0 %2156
        %v2161 = vsel %vm412, %v2152, 0
        %v2164 = vsel %vm412, %v2153, 0
        %2166 = vmatprep.subr.mxu0 0.0
        %2167 = vmatpush1.msra.mxu0 0.0
        %2168 = vmatprep.subr.mxu0 0.0
        %2169 = vmatpush1.msra.mxu0 0.0
        %2170 = vmatprep.subr.mxu0 0.0
        %2171 = vmatpush1.msra.mxu0 0.0
        %2172 = vmatprep.subr.mxu0 0.0
        %2173 = vmatpush1.msra.mxu0 0.0
        %2174 = vmatprep.subr.mxu0 0.0
        %2175 = vmatpush1.msra.mxu0 0.0
        %2176 = vmatprep.subr.mxu0 0.0
        %2177 = vmatpush1.msra.mxu0 0.0
        %2178 = vmatprep.subr.mxu0 0.0
        %2179 = vmatpush1.msra.mxu0 0.0
        %2180 = vmatprep.subr.mxu0 0.0
        %2181 = vmatpush1.msra.mxu0 0.0
        %2182 = vmatprep.subr.mxu0 0.0
        %2183 = vmatpush1.msra.mxu0 0.0
        %2184 = vmatprep.subr.mxu0 0.0
        %2185 = vmatpush1.msra.mxu0 0.0
        %2186 = vmatprep.subr.mxu0 0.0
        %2187 = vmatpush1.msra.mxu0 0.0
        %2188 = vmatprep.subr.mxu0 0.0
        %2189 = vmatpush1.msra.mxu0 0.0
        %2190 = vmatprep.subr.mxu0 0.0
        %2191 = vmatpush1.msra.mxu0 0.0
        %2192 = vmatprep.subr.mxu0 0.0
        %2193 = vmatpush1.msra.mxu0 0.0
        %2194 = vmatprep.subr.mxu0 0.0
        %2195 = vmatpush1.msra.mxu0 %v2157
        %2196 = vmatprep.subr.mxu0 0.0
        %2197 = vmatpush1.msra.mxu0 %v2155
        %2198 = vmatprep.subr.mxu0 0.0
        %2199 = vmatpush2.msra.mxu0 0.0
        %2200 = vmatprep.subr.mxu0 0.0
        %2201 = vmatpush2.msra.mxu0 0.0
        %2202 = vmatprep.subr.mxu0 0.0
        %2203 = vmatpush2.msra.mxu0 0.0
        %2204 = vmatprep.subr.mxu0 0.0
        %2205 = vmatpush2.msra.mxu0 0.0
        %2206 = vmatprep.subr.mxu0 0.0
        %2207 = vmatpush2.msra.mxu0 0.0
        %2208 = vmatprep.subr.mxu0 0.0
        %2209 = vmatpush2.msra.mxu0 0.0
        %2210 = vmatprep.subr.mxu0 0.0
        %2211 = vmatpush2.msra.mxu0 0.0
        %2212 = vmatprep.subr.mxu0 0.0
        %2213 = vmatpush2.msra.mxu0 0.0
        %2214 = vmatprep.subr.mxu0 0.0
        %2215 = vmatpush2.msra.mxu0 0.0
        %2216 = vmatprep.subr.mxu0 0.0
        %2217 = vmatpush2.msra.mxu0 0.0
        %2218 = vmatprep.subr.mxu0 0.0
        %2219 = vmatpush2.msra.mxu0 0.0
        %2220 = vmatprep.subr.mxu0 0.0
        %2221 = vmatpush2.msra.mxu0 0.0
        %2222 = vmatprep.subr.mxu0 0.0
        %2223 = vmatpush2.msra.mxu0 0.0
        %2224 = vmatprep.subr.mxu0 0.0
        %2225 = vmatpush2.msra.mxu0 0.0
        %2226 = vmatprep.subr.mxu0 0.0
        %2227 = vmatpush2.msra.mxu0 0.0
        %2228 = vmatprep.subr.mxu0 0.0
        %2229 = vmatpush2.msra.mxu0 0.0
        %2230 = vmatprep.mubr.f32.mxu0 0.0
        %2231 = vmatmul.mubr.f32.gmra.mxu0 %v2161
        %v2232 = vpop.f32.mrf.mxu0
        %v2233 = vadd.f32 0.0, %v2232
        %v2234 = vpop.f32.mrf.mxu0
        %2235 = vmatprep.mubr.f32.mxu0 0.0
        %2236 = vmatmul.mubr.f32.gmra.mxu0 %v2164
        %v2237 = vpop.f32.mrf.mxu0
        %v2238 = vadd.f32 0.0, %v2237
        %v2239 = vpop.f32.mrf.mxu0
        %2240 = vdwg.mxu0
        %v2241 = vld [vmem:[%s3 + $0x18] sm:$0xf]
        %v2243 = vsel %vm328, %v2233, 0
        %v2246 = vsel %vm328, %v2238, 0
        %v2249 = vsel %vm730, %v2241, 0
        %2251 = vmatprep.subr.mxu0 0.0
        %2252 = vmatpush1.msra.mxu0 0.0
        %2253 = vmatprep.subr.mxu0 0.0
        %2254 = vmatpush1.msra.mxu0 0.0
        %2255 = vmatprep.subr.mxu0 0.0
        %2256 = vmatpush1.msra.mxu0 0.0
        %2257 = vmatprep.subr.mxu0 0.0
        %2258 = vmatpush1.msra.mxu0 0.0
        %2259 = vmatprep.subr.mxu0 0.0
        %2260 = vmatpush1.msra.mxu0 0.0
        %2261 = vmatprep.subr.mxu0 0.0
        %2262 = vmatpush1.msra.mxu0 0.0
        %2263 = vmatprep.subr.mxu0 0.0
        %2264 = vmatpush1.msra.mxu0 0.0
        %2265 = vmatprep.subr.mxu0 0.0
        %2266 = vmatpush1.msra.mxu0 0.0
        %2267 = vmatprep.subr.mxu0 0.0
        %2268 = vmatpush1.msra.mxu0 0.0
        %2269 = vmatprep.subr.mxu0 0.0
        %2270 = vmatpush1.msra.mxu0 0.0
        %2271 = vmatprep.subr.mxu0 0.0
        %2272 = vmatpush1.msra.mxu0 0.0
        %2273 = vmatprep.subr.mxu0 0.0
        %2274 = vmatpush1.msra.mxu0 0.0
        %2275 = vmatprep.subr.mxu0 0.0
        %2276 = vmatpush1.msra.mxu0 0.0
        %2277 = vmatprep.subr.mxu0 0.0
        %2278 = vmatpush1.msra.mxu0 0.0
        %2279 = vmatprep.subr.mxu0 0.0
        %2280 = vmatpush1.msra.mxu0 0.0
        %2281 = vmatprep.subr.mxu0 0.0
        %2282 = vmatpush1.msra.mxu0 %v2249
        %2283 = vmatprep.subr.mxu0 0.0
        %2284 = vmatpush2.msra.mxu0 0.0
        %2285 = vmatprep.subr.mxu0 0.0
        %2286 = vmatpush2.msra.mxu0 0.0
        %2287 = vmatprep.subr.mxu0 0.0
        %2288 = vmatpush2.msra.mxu0 0.0
        %2289 = vmatprep.subr.mxu0 0.0
        %2290 = vmatpush2.msra.mxu0 0.0
        %2291 = vmatprep.subr.mxu0 0.0
        %2292 = vmatpush2.msra.mxu0 0.0
        %2293 = vmatprep.subr.mxu0 0.0
        %2294 = vmatpush2.msra.mxu0 0.0
        %2295 = vmatprep.subr.mxu0 0.0
        %2296 = vmatpush2.msra.mxu0 0.0
        %2297 = vmatprep.subr.mxu0 0.0
        %2298 = vmatpush2.msra.mxu0 0.0
        %2299 = vmatprep.subr.mxu0 0.0
        %2300 = vmatpush2.msra.mxu0 0.0
        %2301 = vmatprep.subr.mxu0 0.0
        %2302 = vmatpush2.msra.mxu0 0.0
        %2303 = vmatprep.subr.mxu0 0.0
        %2304 = vmatpush2.msra.mxu0 0.0
        %2305 = vmatprep.subr.mxu0 0.0
        %2306 = vmatpush2.msra.mxu0 0.0
        %2307 = vmatprep.subr.mxu0 0.0
        %2308 = vmatpush2.msra.mxu0 0.0
        %2309 = vmatprep.subr.mxu0 0.0
        %2310 = vmatpush2.msra.mxu0 0.0
        %2311 = vmatprep.subr.mxu0 0.0
        %2312 = vmatpush2.msra.mxu0 0.0
        %2313 = vmatprep.subr.mxu0 0.0
        %2314 = vmatpush2.msra.mxu0 0.0
        %2315 = vmatprep.mubr.f32.mxu0 0.0
        %2316 = vmatmul.mubr.f32.gmra.mxu0 %v2243
        %v2317 = vpop.f32.mrf.mxu0
        %v2318 = vadd.f32 0.0, %v2317
        %v2319 = vpop.f32.mrf.mxu0
        %2320 = vmatprep.mubr.f32.mxu0 0.0
        %2321 = vmatmul.mubr.f32.gmra.mxu0 %v2246
        %v2322 = vpop.f32.mrf.mxu0
        %v2323 = vadd.f32 0.0, %v2322
        %v2324 = vpop.f32.mrf.mxu0
        %2325 = vdwg.mxu0
        %v2326 = vadd.f32 %v2039, %v2318
        %v2327 = vadd.f32 %v2040, %v2323
        %2328 = vrot.lane.b32.xlu0 %v320, 100
        %v2329 = vpop.permute.xlu0 %2328
        %2330 = vrot.lane.b32.xlu0 %v321, 100
        %v2331 = vpop.permute.xlu0 %2330
        %2332 = vrot.lane.b32.xlu0 %v320, 68
        %v2333 = vpop.permute.xlu0 %2332
        %2334 = vrot.lane.b32.xlu0 %v321, 68
        %v2335 = vpop.permute.xlu0 %2334
        %v2336 = vsel %vm328, %v2329, 0
        %v2338 = vsel %vm328, %v2331, 0
        %v2340 = vsel %vm328, %v2333, 0
        %v2342 = vsel %vm328, %v2335, 0
        %2344 = vmatprep.subr.mxu0 0.0
        %2345 = vmatpush1.xpose.msra.mxu0 0.0
        %2346 = vmatprep.subr.mxu0 0.0
        %2347 = vmatpush1.xpose.msra.mxu0 0.0
        %2348 = vmatprep.subr.mxu0 0.0
        %2349 = vmatpush1.xpose.msra.mxu0 0.0
        %2350 = vmatprep.subr.mxu0 0.0
        %2351 = vmatpush1.xpose.msra.mxu0 0.0
        %2352 = vmatprep.subr.mxu0 0.0
        %2353 = vmatpush1.xpose.msra.mxu0 0.0
        %2354 = vmatprep.subr.mxu0 0.0
        %2355 = vmatpush1.xpose.msra.mxu0 0.0
        %2356 = vmatprep.subr.mxu0 0.0
        %2357 = vmatpush1.xpose.msra.mxu0 0.0
        %2358 = vmatprep.subr.mxu0 0.0
        %2359 = vmatpush1.xpose.msra.mxu0 0.0
        %2360 = vmatprep.subr.mxu0 0.0
        %2361 = vmatpush1.xpose.msra.mxu0 0.0
        %2362 = vmatprep.subr.mxu0 0.0
        %2363 = vmatpush1.xpose.msra.mxu0 0.0
        %2364 = vmatprep.subr.mxu0 0.0
        %2365 = vmatpush1.xpose.msra.mxu0 0.0
        %2366 = vmatprep.subr.mxu0 0.0
        %2367 = vmatpush1.xpose.msra.mxu0 0.0
        %2368 = vmatprep.subr.mxu0 0.0
        %2369 = vmatpush1.xpose.msra.mxu0 0.0
        %2370 = vmatprep.subr.mxu0 0.0
        %2371 = vmatpush1.xpose.msra.mxu0 0.0
        %2372 = vmatprep.subr.mxu0 0.0
        %2373 = vmatpush1.xpose.msra.mxu0 %v2342
        %2374 = vmatprep.subr.mxu0 0.0
        %2375 = vmatpush1.xpose.msra.mxu0 %v2340
        %2376 = vmatprep.subr.mxu0 0.0
        %2377 = vmatpush2.xpose.msra.mxu0 0.0
        %2378 = vmatprep.subr.mxu0 0.0
        %2379 = vmatpush2.xpose.msra.mxu0 0.0
        %2380 = vmatprep.subr.mxu0 0.0
        %2381 = vmatpush2.xpose.msra.mxu0 0.0
        %2382 = vmatprep.subr.mxu0 0.0
        %2383 = vmatpush2.xpose.msra.mxu0 0.0
        %2384 = vmatprep.subr.mxu0 0.0
        %2385 = vmatpush2.xpose.msra.mxu0 0.0
        %2386 = vmatprep.subr.mxu0 0.0
        %2387 = vmatpush2.xpose.msra.mxu0 0.0
        %2388 = vmatprep.subr.mxu0 0.0
        %2389 = vmatpush2.xpose.msra.mxu0 0.0
        %2390 = vmatprep.subr.mxu0 0.0
        %2391 = vmatpush2.xpose.msra.mxu0 0.0
        %2392 = vmatprep.subr.mxu0 0.0
        %2393 = vmatpush2.xpose.msra.mxu0 0.0
        %2394 = vmatprep.subr.mxu0 0.0
        %2395 = vmatpush2.xpose.msra.mxu0 0.0
        %2396 = vmatprep.subr.mxu0 0.0
        %2397 = vmatpush2.xpose.msra.mxu0 0.0
        %2398 = vmatprep.subr.mxu0 0.0
        %2399 = vmatpush2.xpose.msra.mxu0 0.0
        %2400 = vmatprep.subr.mxu0 0.0
        %2401 = vmatpush2.xpose.msra.mxu0 0.0
        %2402 = vmatprep.subr.mxu0 0.0
        %2403 = vmatpush2.xpose.msra.mxu0 0.0
        %2404 = vmatprep.subr.mxu0 0.0
        %2405 = vmatpush2.xpose.msra.mxu0 0.0
        %2406 = vmatprep.subr.mxu0 0.0
        %2407 = vmatpush2.xpose.msra.mxu0 0.0
        %2408 = vmatprep.mubr.f32.mxu0 0.0
        %2409 = vmatmul.mubr.f32.gmra.mxu0 %v2336
        %v2410 = vpop.f32.mrf.mxu0
        %v2411 = vadd.f32 0.0, %v2410
        %v2412 = vpop.f32.mrf.mxu0
        %2413 = vmatprep.mubr.f32.mxu0 0.0
        %2414 = vmatmul.mubr.f32.gmra.mxu0 %v2338
        %v2415 = vpop.f32.mrf.mxu0
        %v2416 = vadd.f32 0.0, %v2415
        %v2417 = vpop.f32.mrf.mxu0
        %2418 = vdwg.mxu0
        %v2419 = vsel %vm412, %v2411, -inf
        %2420 = vmax.xlane.f32.xlu0 %v2419
        %v2421 = vpop.xlane.xlu0 %2420
        %v2422 = vsel %vm412, %v2416, -inf
        %2423 = vmax.xlane.f32.xlu0 %v2422
        %v2424 = vpop.xlane.xlu0 %2423
        %v2425 = vsub.f32 %v2411, %v2421
        %v2426 = vsub.f32 %v2416, %v2424
        %v2427 = vmul.f32 %v2425, 1.442695
        %v2428 = vpow.pop %v2427
        %v2429 = vmul.f32 %v2426, 1.442695
        %v2430 = vpow.pop %v2429
        %v2431 = vsel %vm412, %v2428, 0.0
        %2432 = vadd.xlane.f32.xlu0 %v2431
        %v2433 = vpop.xlane.xlu0 %2432
        %v2434 = vsel %vm412, %v2430, 0.0
        %2435 = vadd.xlane.f32.xlu0 %v2434
        %v2436 = vpop.xlane.xlu0 %2435
        %v2437 = vrcp.pop %v2433
        %v2438 = vrcp.pop %v2436
        %v2439 = vmul.f32 %v2428, %v2437
        %v2440 = vmul.f32 %v2430, %v2438
        %2441 = vrot.lane.b32.xlu0 %v320, 36
        %v2442 = vpop.permute.xlu0 %2441
        %2443 = vrot.lane.b32.xlu0 %v321, 36
        %v2444 = vpop.permute.xlu0 %2443
        %v2448 = vsel %vm412, %v2439, 0
        %v2451 = vsel %vm412, %v2440, 0
        %2453 = vmatprep.subr.mxu0 0.0
        %2454 = vmatpush1.msra.mxu0 0.0
        %2455 = vmatprep.subr.mxu0 0.0
        %2456 = vmatpush1.msra.mxu0 0.0
        %2457 = vmatprep.subr.mxu0 0.0
        %2458 = vmatpush1.msra.mxu0 0.0
        %2459 = vmatprep.subr.mxu0 0.0
        %2460 = vmatpush1.msra.mxu0 0.0
        %2461 = vmatprep.subr.mxu0 0.0
        %2462 = vmatpush1.msra.mxu0 0.0
        %2463 = vmatprep.subr.mxu0 0.0
        %2464 = vmatpush1.msra.mxu0 0.0
        %2465 = vmatprep.subr.mxu0 0.0
        %2466 = vmatpush1.msra.mxu0 0.0
        %2467 = vmatprep.subr.mxu0 0.0
        %2468 = vmatpush1.msra.mxu0 0.0
        %2469 = vmatprep.subr.mxu0 0.0
        %2470 = vmatpush1.msra.mxu0 0.0
        %2471 = vmatprep.subr.mxu0 0.0
        %2472 = vmatpush1.msra.mxu0 0.0
        %2473 = vmatprep.subr.mxu0 0.0
        %2474 = vmatpush1.msra.mxu0 0.0
        %2475 = vmatprep.subr.mxu0 0.0
        %2476 = vmatpush1.msra.mxu0 0.0
        %2477 = vmatprep.subr.mxu0 0.0
        %2478 = vmatpush1.msra.mxu0 0.0
        %2479 = vmatprep.subr.mxu0 0.0
        %2480 = vmatpush1.msra.mxu0 0.0
        %2481 = vmatprep.subr.mxu0 0.0
        %2482 = vmatpush1.msra.mxu0 %v2444
        %2483 = vmatprep.subr.mxu0 0.0
        %2484 = vmatpush1.msra.mxu0 %v2442
        %2485 = vmatprep.subr.mxu0 0.0
        %2486 = vmatpush2.msra.mxu0 0.0
        %2487 = vmatprep.subr.mxu0 0.0
        %2488 = vmatpush2.msra.mxu0 0.0
        %2489 = vmatprep.subr.mxu0 0.0
        %2490 = vmatpush2.msra.mxu0 0.0
        %2491 = vmatprep.subr.mxu0 0.0
        %2492 = vmatpush2.msra.mxu0 0.0
        %2493 = vmatprep.subr.mxu0 0.0
        %2494 = vmatpush2.msra.mxu0 0.0
        %2495 = vmatprep.subr.mxu0 0.0
        %2496 = vmatpush2.msra.mxu0 0.0
        %2497 = vmatprep.subr.mxu0 0.0
        %2498 = vmatpush2.msra.mxu0 0.0
        %2499 = vmatprep.subr.mxu0 0.0
        %2500 = vmatpush2.msra.mxu0 0.0
        %2501 = vmatprep.subr.mxu0 0.0
        %2502 = vmatpush2.msra.mxu0 0.0
        %2503 = vmatprep.subr.mxu0 0.0
        %2504 = vmatpush2.msra.mxu0 0.0
        %2505 = vmatprep.subr.mxu0 0.0
        %2506 = vmatpush2.msra.mxu0 0.0
        %2507 = vmatprep.subr.mxu0 0.0
        %2508 = vmatpush2.msra.mxu0 0.0
        %2509 = vmatprep.subr.mxu0 0.0
        %2510 = vmatpush2.msra.mxu0 0.0
        %2511 = vmatprep.subr.mxu0 0.0
        %2512 = vmatpush2.msra.mxu0 0.0
        %2513 = vmatprep.subr.mxu0 0.0
        %2514 = vmatpush2.msra.mxu0 0.0
        %2515 = vmatprep.subr.mxu0 0.0
        %2516 = vmatpush2.msra.mxu0 0.0
        %2517 = vmatprep.mubr.f32.mxu0 0.0
        %2518 = vmatmul.mubr.f32.gmra.mxu0 %v2448
        %v2519 = vpop.f32.mrf.mxu0
        %v2520 = vadd.f32 0.0, %v2519
        %v2521 = vpop.f32.mrf.mxu0
        %2522 = vmatprep.mubr.f32.mxu0 0.0
        %2523 = vmatmul.mubr.f32.gmra.mxu0 %v2451
        %v2524 = vpop.f32.mrf.mxu0
        %v2525 = vadd.f32 0.0, %v2524
        %v2526 = vpop.f32.mrf.mxu0
        %2527 = vdwg.mxu0
        %v2528 = vld [vmem:[%s3 + $0x1c] sm:$0xf]
        %v2530 = vsel %vm328, %v2520, 0
        %v2533 = vsel %vm328, %v2525, 0
        %v2536 = vsel %vm730, %v2528, 0
        %2538 = vmatprep.subr.mxu0 0.0
        %2539 = vmatpush1.msra.mxu0 0.0
        %2540 = vmatprep.subr.mxu0 0.0
        %2541 = vmatpush1.msra.mxu0 0.0
        %2542 = vmatprep.subr.mxu0 0.0
        %2543 = vmatpush1.msra.mxu0 0.0
        %2544 = vmatprep.subr.mxu0 0.0
        %2545 = vmatpush1.msra.mxu0 0.0
        %2546 = vmatprep.subr.mxu0 0.0
        %2547 = vmatpush1.msra.mxu0 0.0
        %2548 = vmatprep.subr.mxu0 0.0
        %2549 = vmatpush1.msra.mxu0 0.0
        %2550 = vmatprep.subr.mxu0 0.0
        %2551 = vmatpush1.msra.mxu0 0.0
        %2552 = vmatprep.subr.mxu0 0.0
        %2553 = vmatpush1.msra.mxu0 0.0
        %2554 = vmatprep.subr.mxu0 0.0
        %2555 = vmatpush1.msra.mxu0 0.0
        %2556 = vmatprep.subr.mxu0 0.0
        %2557 = vmatpush1.msra.mxu0 0.0
        %2558 = vmatprep.subr.mxu0 0.0
        %2559 = vmatpush1.msra.mxu0 0.0
        %2560 = vmatprep.subr.mxu0 0.0
        %2561 = vmatpush1.msra.mxu0 0.0
        %2562 = vmatprep.subr.mxu0 0.0
        %2563 = vmatpush1.msra.mxu0 0.0
        %2564 = vmatprep.subr.mxu0 0.0
        %2565 = vmatpush1.msra.mxu0 0.0
        %2566 = vmatprep.subr.mxu0 0.0
        %2567 = vmatpush1.msra.mxu0 0.0
        %2568 = vmatprep.subr.mxu0 0.0
        %2569 = vmatpush1.msra.mxu0 %v2536
        %2570 = vmatprep.subr.mxu0 0.0
        %2571 = vmatpush2.msra.mxu0 0.0
        %2572 = vmatprep.subr.mxu0 0.0
        %2573 = vmatpush2.msra.mxu0 0.0
        %2574 = vmatprep.subr.mxu0 0.0
        %2575 = vmatpush2.msra.mxu0 0.0
        %2576 = vmatprep.subr.mxu0 0.0
        %2577 = vmatpush2.msra.mxu0 0.0
        %2578 = vmatprep.subr.mxu0 0.0
        %2579 = vmatpush2.msra.mxu0 0.0
        %2580 = vmatprep.subr.mxu0 0.0
        %2581 = vmatpush2.msra.mxu0 0.0
        %2582 = vmatprep.subr.mxu0 0.0
        %2583 = vmatpush2.msra.mxu0 0.0
        %2584 = vmatprep.subr.mxu0 0.0
        %2585 = vmatpush2.msra.mxu0 0.0
        %2586 = vmatprep.subr.mxu0 0.0
        %2587 = vmatpush2.msra.mxu0 0.0
        %2588 = vmatprep.subr.mxu0 0.0
        %2589 = vmatpush2.msra.mxu0 0.0
        %2590 = vmatprep.subr.mxu0 0.0
        %2591 = vmatpush2.msra.mxu0 0.0
        %2592 = vmatprep.subr.mxu0 0.0
        %2593 = vmatpush2.msra.mxu0 0.0
        %2594 = vmatprep.subr.mxu0 0.0
        %2595 = vmatpush2.msra.mxu0 0.0
        %2596 = vmatprep.subr.mxu0 0.0
        %2597 = vmatpush2.msra.mxu0 0.0
        %2598 = vmatprep.subr.mxu0 0.0
        %2599 = vmatpush2.msra.mxu0 0.0
        %2600 = vmatprep.subr.mxu0 0.0
        %2601 = vmatpush2.msra.mxu0 0.0
        %2602 = vmatprep.mubr.f32.mxu0 0.0
        %2603 = vmatmul.mubr.f32.gmra.mxu0 %v2530
        %v2604 = vpop.f32.mrf.mxu0
        %v2605 = vadd.f32 0.0, %v2604
        %v2606 = vpop.f32.mrf.mxu0
        %2607 = vmatprep.mubr.f32.mxu0 0.0
        %2608 = vmatmul.mubr.f32.gmra.mxu0 %v2533
        %v2609 = vpop.f32.mrf.mxu0
        %v2610 = vadd.f32 0.0, %v2609
        %v2611 = vpop.f32.mrf.mxu0
        %2612 = vdwg.mxu0
        %v2613 = vadd.f32 %v2326, %v2605
        %v2614 = vadd.f32 %v2327, %v2610
        %v2615 = vld [vmem:[%s4] sm:$0x1]
        %v2617 = vlaneseq
        %v2618 = vshrl.u32 %v2617, 7
        %v2619 = vsub.s32 0, %v2618
        %v2620 = vrot.slane %v2615, %v2619
        %v2622 = vadd.f32 %v2613, %v2620
        %v2623 = vadd.f32 %v2614, %v2620
        %v2624 = vmul.f32 %v2622, 0.999995
        %v2625 = vmul.f32 %v2623, 0.999995
        %v2626 = vmax.f32 %v2624, 0.0
        %v2627 = vmax.f32 %v2625, 0.0
        %2628 = vst.msk [vmem:[%s217] sm:$0xff] %vm236, %v2626
        %2629 = vst.msk [vmem:[%s217 + $0x8] sm:$0xff] %vm236, %v2627
        %s2630 = sand.u32 %s137, 1
        %s2631 = scalar_lea.sflag [#allocation3], %s2630
        %s2632 = sand.u32 %s137, 1
        %s2633 = smul.addr %s2632, 16
        %s2634 = scalar_lea.vmem [#allocation2], %s2633
        // Predicated region
        $region41: #{graph_attention_forward.1} parent=39 // pred_check
          %p2635 = pneg %p147
        $region42: #{graph_attention_forward.1} parent=39 // pred_check_branch
          %2637 = sbr.rel (%p2635) target = $region44
        $region43: #{graph_attention_forward.1} parent=39 // pred_region
          %s2639 = ssub.s32 256, 256
          %2640 = vsyncadd %s2631, %s2639
          %s2641 = smul.addr %s19, 2
          %s2642 = smul.addr %s2641, 128
          %s2643 = scalar_lea.hbm %s5, %s2642
          %s2644 = sshll.u32 %s2634, 4
          %s2645 = int_to_ptr.vmem [resolvable:$true] %s2644
          %2650 = dma.vmem_to_hbm [thread:$0]  %s2645, 256, %s2643, %s2631, 128, 128, 8
        $region44: #{graph_attention_forward.1} parent=39 // pred_fallthru
          _
      $region40: #{graph_attention_forward.1} parent=5 // pred_fallthru
        _
      %p2651 = scmp.le.s32.totalorder 2, %s14
      // Predicated region
      $region45: #{graph_attention_forward.1} parent=5 // pred_check
        %p2652 = pneg %p2651
      $region46: #{graph_attention_forward.1} parent=5 // pred_check_branch
        %2654 = sbr.rel (%p2652) target = $region48
      $region47: #{graph_attention_forward.1} parent=5 // pred_region
        %s2655 = ssub.s32 %s14, 2
        // Predicated region
        $region49: #{graph_attention_forward.1} parent=47 // pred_check
          %p2656 = pneg %p153
        $region50: #{graph_attention_forward.1} parent=47 // pred_check_branch
          %2658 = sbr.rel (%p2656) target = $region52
        $region51: #{graph_attention_forward.1} parent=47 // pred_region
          %s2659 = sand.u32 %s138, 1
          %s2660 = scalar_lea.sflag [#allocation3], %s2659
          %s2661 = sand.u32 %s138, 1
          %s2662 = smul.addr %s2661, 16
          %s2663 = scalar_lea.vmem [#allocation2], %s2662
          %2664 = dma.done %s2660, 256
        $region52: #{graph_attention_forward.1} parent=47 // pred_fallthru
          _
      $region48: #{graph_attention_forward.1} parent=5 // pred_fallthru
        _
    $region6: #{graph_attention_forward.1} parent=1 // loop_footer
      %s18 = sadd.s32 1, %s14
    $region7: #{graph_attention_forward.1} parent=1 // loop_footer_branch
      %13 = sbr.rel target = $region3
    $region8: #{graph_attention_forward.1} parent=1 // loop_exit
      _
    %2665 = vsyncpa [#allocation3], 1
    %s2666 = scalar_lea.sflag [#allocation3], 1
    %2667 = vsyncpa %s2666, 1

</llo_original>
